<compile_context>
chip_gen: v6e
topology: v6e:2x2x1
jax: 0.10.0
libtpu: 0.0.40
codegen_flags: <defaults>
</compile_context>

<pallas_src>
import functools

import jax
import jax.numpy as jnp
from jax import lax
from jax.experimental import pallas as pl
from jax.experimental.pallas import tpu as pltpu


def feature_extractor_kernel(x_ref, w_ih_ref, w_hh_ref, b_ref,
                             w_exp_ref, b_cap_ref, out_ref, *, mm_dtype):
    """Fused LSTM recurrence + capsule (Linear over time) + sigmoid.

    x_ref:     (B, T, D)      batch_first input (as in PyTorch)
    w_ih_ref:  (D, 4H)        mm_dtype
    w_hh_ref:  (H, 4H)        mm_dtype
    b_ref:     (1, 4H)        f32, b_ih + b_hh
    w_exp_ref: (T*H, H*K)     mm_dtype, block-diagonal expansion of capsule weight
    b_cap_ref: (1, H*K)       f32, capsule bias tiled so lane h*K+k holds b_cap[k]
    out_ref:   (B, H*K)       f32, lane-dense output (== torch view(B, -1) order)
    """
    B, T, D = x_ref.shape
    H = w_hh_ref.shape[0]
    H4 = 4 * H

    # Weights resident for the whole kernel.
    w_ih = w_ih_ref[...]
    w_hh = w_hh_ref[...]
    b = b_ref[...]

    # --- (1) hoisted input projection: one batched MXU matmul, off the
    #         recurrence critical path. ---------------------------------------
    x2 = x_ref[...].reshape(B * T, D).astype(mm_dtype)              # (B*T, D)
    gx = jnp.dot(x2, w_ih, preferred_element_type=jnp.float32) + b  # (B*T, 4H) f32
    gx = gx.reshape(B, T, H4)                                       # (B, T, 4H)

    # --- (2) fully unrolled recurrence (static T): per step, only h @ w_hh
    #         plus elementwise gate math remains on the serial chain. ---------
    h = jnp.zeros((B, H), jnp.float32)
    c = jnp.zeros((B, H), jnp.float32)
    h_cols = []
    for t in range(T):
        gates = gx[:, t, :] + jnp.dot(
            h.astype(mm_dtype), w_hh, preferred_element_type=jnp.float32)  # (B, 4H)

        # PyTorch LSTM gate order: input, forget, cell(g), output.
        # (Static 32-lane slices of the packed 128-lane gates vreg; kept simple
        #  rather than the roll/mask trick -- correctness-first, tiny cost.)
        i = jax.nn.sigmoid(gates[:, 0 * H:1 * H])
        f = jax.nn.sigmoid(gates[:, 1 * H:2 * H])
        g = jnp.tanh(gates[:, 2 * H:3 * H])
        o = jax.nn.sigmoid(gates[:, 3 * H:4 * H])

        c = f * c + i * g
        h = o * jnp.tanh(c)
        h_cols.append(h)

    # --- (3) post-loop capsule: one (B, T*H) @ (T*H, H*K) MXU matmul that also
    #         folds in the time-transpose and the final flatten. --------------
    hs = jnp.concatenate(h_cols, axis=1).astype(mm_dtype)           # (B, T*H)
    pre = jnp.dot(hs, w_exp_ref[...],
                  preferred_element_type=jnp.float32)               # (B, H*K)
    out = jax.nn.sigmoid(pre + b_cap_ref[...])                      # dense (B, 128)
    # Dropout(p=0.4): identity in eval mode.
    out_ref[...] = out.astype(out_ref.dtype)


def feature_extractor(x, params, *, mm_dtype=jnp.bfloat16):
    """x: (B, T, D_in) float32 (PyTorch batch_first convention).

    Returns (B, H*K) == torch's sigmoid(capsule(lstm_out.transpose(1,2))).view(B,-1)
    in eval mode.
    """
    B, T, D = x.shape
    H = params["w_hh"].shape[0]
    K = params["w_cap"].shape[1]

    w_ih = params["w_ih"].astype(mm_dtype)
    w_hh = params["w_hh"].astype(mm_dtype)
    b = params["b"]                                # (1, 4H) f32

    # Block-diagonal expansion of the capsule weight so the kernel can emit the
    # flattened (B, H*K) result with a single dense matmul:
    #   W_exp[t*H + h', h*K + k] = w_cap[t, k] * (h' == h)
    w_cap = params["w_cap"]                        # (T, K)
    eye = jnp.eye(H, dtype=jnp.float32)
    w_exp = (w_cap[:, None, None, :] * eye[None, :, :, None]
             ).reshape(T * H, H * K).astype(mm_dtype)
    # Capsule bias tiled so lane (h*K + k) carries b_cap[k].
    b_cap_dense = jnp.tile(params["b_cap"], (1, H))  # (1, H*K) f32

    kernel = functools.partial(feature_extractor_kernel, mm_dtype=mm_dtype)

    out = pl.pallas_call(
        kernel,
        out_shape=jax.ShapeDtypeStruct((B, H * K), jnp.float32),
        in_specs=[pl.BlockSpec(memory_space=pltpu.MemorySpace.VMEM)] * 6,
        out_specs=pl.BlockSpec(memory_space=pltpu.MemorySpace.VMEM),
    )(x, w_ih, w_hh, b, w_exp, b_cap_dense)
    return out


def feature_extractor_ref(x, params):
    """Pure-JAX f32 reference (mirrors the PyTorch forward in eval mode)."""
    B, T, D = x.shape
    H = params["w_hh"].shape[0]

    def step(carry, x_t):
        h, c = carry
        gates = x_t @ params["w_ih"] + h @ params["w_hh"] + params["b"]
        i = jax.nn.sigmoid(gates[:, 0 * H:1 * H])
        f = jax.nn.sigmoid(gates[:, 1 * H:2 * H])
        g = jnp.tanh(gates[:, 2 * H:3 * H])
        o = jax.nn.sigmoid(gates[:, 3 * H:4 * H])
        c = f * c + i * g
        h = o * jnp.tanh(c)
        return (h, c), h

    h0 = jnp.zeros((B, H), jnp.float32)
    c0 = jnp.zeros((B, H), jnp.float32)
    _, hs = lax.scan(step, (h0, c0), jnp.transpose(x, (1, 0, 2)))  # hs: (T,B,H)
    lstm_out = jnp.transpose(hs, (1, 0, 2))                        # (B,T,H)
    out = jnp.transpose(lstm_out, (0, 2, 1))                       # (B,H,T)
    cap = out @ params["w_cap"] + params["b_cap"][0]               # (B,H,K)
    return jax.nn.sigmoid(cap.reshape(B, -1))


def init_params(key, lstm_input_dim, lstm_hidden_dim, time_steps, K):
    H = lstm_hidden_dim
    ks = jax.random.split(key, 6)
    s = 1.0 / jnp.sqrt(H)
    # PyTorch stores weight_ih_l0: (4H, D), weight_hh_l0: (4H, H),
    # capsule.weight: (K, T); we store the transposes for x @ W form.
    w_ih = jax.random.uniform(ks[0], (lstm_input_dim, 4 * H), jnp.float32, -s, s)
    w_hh = jax.random.uniform(ks[1], (H, 4 * H), jnp.float32, -s, s)
    b_ih = jax.random.uniform(ks[2], (4 * H,), jnp.float32, -s, s)
    b_hh = jax.random.uniform(ks[3], (4 * H,), jnp.float32, -s, s)
    sc = 1.0 / jnp.sqrt(time_steps)
    w_cap = jax.random.uniform(ks[4], (time_steps, K), jnp.float32, -sc, sc)
    b_cap = jax.random.uniform(ks[5], (1, K), jnp.float32, -sc, sc)
    return {
        "w_ih": w_ih,
        "w_hh": w_hh,
        "b": (b_ih + b_hh)[None, :],
        "w_cap": w_cap,
        "b_cap": b_cap,
    }


if __name__ == "__main__":
    # Small shapes consistent with the module:
    #   lstm_input_dim=8, lstm_hidden_dim=32, time_steps=8, K=4, batch=2
    B, T, D_IN, H, K = 2, 8, 8, 32, 4

    key = jax.random.PRNGKey(0)
    k_x, k_p = jax.random.split(key)
    x = jax.random.normal(k_x, (B, T, D_IN), jnp.float32)
    params = init_params(k_p, D_IN, H, T, K)

    ref = feature_extractor_ref(x, params)

    # f32-matmul path: tight check against the pure-JAX reference.
    out_f32 = jax.block_until_ready(feature_extractor(x, params, mm_dtype=jnp.float32))
    assert out_f32.shape == (B, H * K), out_f32.shape
    assert jnp.allclose(out_f32, ref, atol=1e-5, rtol=1e-5), \
        float(jnp.max(jnp.abs(out_f32 - ref)))

    # Default bf16-operand / f32-accumulate path (MXU-native on v6e/v7x);
    # elementwise state math stays f32, so only a relaxed tolerance is needed.
    out_bf16 = jax.block_until_ready(feature_extractor(x, params))
    assert out_bf16.shape == (B, H * K), out_bf16.shape
    assert jnp.allclose(out_bf16, ref, atol=5e-2), \
        float(jnp.max(jnp.abs(out_bf16 - ref)))

    print("KERNEL_OK")
</pallas_src>

<mosaic_0001>
module attributes {stable_mosaic.version = 11 : i64} {
  func.func @feature_extractor_kernel(%arg0: memref<2x8x8xf32, #tpu.memory_space<vmem>>, %arg1: memref<8x128xf32, #tpu.memory_space<vmem>>, %arg2: memref<32x128xf32, #tpu.memory_space<vmem>>, %arg3: memref<1x128xf32, #tpu.memory_space<vmem>>, %arg4: memref<256x128xf32, #tpu.memory_space<vmem>>, %arg5: memref<1x128xf32, #tpu.memory_space<vmem>>, %arg6: memref<2x128xf32, #tpu.memory_space<vmem>>) attributes {dimension_semantics = [], scalar_prefetch = 0 : i64, scratch_operands = 0 : i64, tpu.core_type = #tpu.core_type<tc>} {
    %c0 = arith.constant 0 : index
    %c0_0 = arith.constant 0 : index
    %0 = vector.load %arg1[%c0, %c0_0] : memref<8x128xf32, #tpu.memory_space<vmem>>, vector<8x128xf32>
    %c0_1 = arith.constant 0 : index
    %c0_2 = arith.constant 0 : index
    %1 = vector.load %arg2[%c0_1, %c0_2] : memref<32x128xf32, #tpu.memory_space<vmem>>, vector<32x128xf32>
    %c0_3 = arith.constant 0 : index
    %c0_4 = arith.constant 0 : index
    %2 = vector.load %arg3[%c0_3, %c0_4] : memref<1x128xf32, #tpu.memory_space<vmem>>, vector<1x128xf32>
    %c0_5 = arith.constant 0 : index
    %c0_6 = arith.constant 0 : index
    %c0_7 = arith.constant 0 : index
    %3 = vector.load %arg0[%c0_5, %c0_6, %c0_7] : memref<2x8x8xf32, #tpu.memory_space<vmem>>, vector<2x8x8xf32>
    %4 = vector.shape_cast %3 : vector<2x8x8xf32> to vector<16x8xf32>
    %cst = arith.constant dense<0.000000e+00> : vector<16x128xf32>
    %5 = tpu.matmul %4, %0, %cst {dimension_numbers = #tpu.dot_dimension_numbers<[1], [0], [0], [1], [0, 0, 1, 1], [], []>} : vector<16x8xf32>, vector<8x128xf32>, vector<16x128xf32> -> vector<16x128xf32>
    %6 = vector.broadcast %2 : vector<1x128xf32> to vector<16x128xf32>
    %7 = arith.addf %5, %6 : vector<16x128xf32>
    %8 = vector.shape_cast %7 : vector<16x128xf32> to vector<2x8x128xf32>
    %cst_8 = arith.constant 0.000000e+00 : f32
    %9 = vector.broadcast %cst_8 : f32 to vector<2x32xf32>
    %cst_9 = arith.constant 0.000000e+00 : f32
    %10 = vector.broadcast %cst_9 : f32 to vector<2x32xf32>
    %11 = vector.extract_strided_slice %8 {offsets = [0, 0, 0], sizes = [2, 1, 128], strides = [1, 1, 1]} : vector<2x8x128xf32> to vector<2x1x128xf32>
    %12 = vector.shape_cast %11 : vector<2x1x128xf32> to vector<2x128xf32>
    %cst_10 = arith.constant dense<0.000000e+00> : vector<2x128xf32>
    %13 = tpu.matmul %9, %1, %cst_10 {dimension_numbers = #tpu.dot_dimension_numbers<[1], [0], [0], [1], [0, 0, 1, 1], [], []>} : vector<2x32xf32>, vector<32x128xf32>, vector<2x128xf32> -> vector<2x128xf32>
    %14 = arith.addf %12, %13 : vector<2x128xf32>
    %15 = vector.extract_strided_slice %14 {offsets = [0, 0], sizes = [2, 32], strides = [1, 1]} : vector<2x128xf32> to vector<2x32xf32>
    %16 = arith.negf %15 : vector<2x32xf32>
    %17 = math.exp %16 : vector<2x32xf32>
    %cst_11 = arith.constant 1.000000e+00 : f32
    %18 = vector.broadcast %cst_11 : f32 to vector<2x32xf32>
    %19 = arith.addf %18, %17 : vector<2x32xf32>
    %20 = arith.divf %18, %19 : vector<2x32xf32>
    %21 = vector.extract_strided_slice %14 {offsets = [0, 32], sizes = [2, 32], strides = [1, 1]} : vector<2x128xf32> to vector<2x32xf32>
    %22 = arith.negf %21 : vector<2x32xf32>
    %23 = math.exp %22 : vector<2x32xf32>
    %cst_12 = arith.constant 1.000000e+00 : f32
    %24 = vector.broadcast %cst_12 : f32 to vector<2x32xf32>
    %25 = arith.addf %24, %23 : vector<2x32xf32>
    %26 = arith.divf %24, %25 : vector<2x32xf32>
    %27 = vector.extract_strided_slice %14 {offsets = [0, 64], sizes = [2, 32], strides = [1, 1]} : vector<2x128xf32> to vector<2x32xf32>
    %28 = math.tanh %27 : vector<2x32xf32>
    %29 = vector.extract_strided_slice %14 {offsets = [0, 96], sizes = [2, 32], strides = [1, 1]} : vector<2x128xf32> to vector<2x32xf32>
    %30 = arith.negf %29 : vector<2x32xf32>
    %31 = math.exp %30 : vector<2x32xf32>
    %cst_13 = arith.constant 1.000000e+00 : f32
    %32 = vector.broadcast %cst_13 : f32 to vector<2x32xf32>
    %33 = arith.addf %32, %31 : vector<2x32xf32>
    %34 = arith.divf %32, %33 : vector<2x32xf32>
    %35 = arith.mulf %26, %10 : vector<2x32xf32>
    %36 = arith.mulf %20, %28 : vector<2x32xf32>
    %37 = arith.addf %35, %36 : vector<2x32xf32>
    %38 = math.tanh %37 : vector<2x32xf32>
    %39 = arith.mulf %34, %38 : vector<2x32xf32>
    %40 = vector.extract_strided_slice %8 {offsets = [0, 1, 0], sizes = [2, 1, 128], strides = [1, 1, 1]} : vector<2x8x128xf32> to vector<2x1x128xf32>
    %41 = vector.shape_cast %40 : vector<2x1x128xf32> to vector<2x128xf32>
    %cst_14 = arith.constant dense<0.000000e+00> : vector<2x128xf32>
    %42 = tpu.matmul %39, %1, %cst_14 {dimension_numbers = #tpu.dot_dimension_numbers<[1], [0], [0], [1], [0, 0, 1, 1], [], []>} : vector<2x32xf32>, vector<32x128xf32>, vector<2x128xf32> -> vector<2x128xf32>
    %43 = arith.addf %41, %42 : vector<2x128xf32>
    %44 = vector.extract_strided_slice %43 {offsets = [0, 0], sizes = [2, 32], strides = [1, 1]} : vector<2x128xf32> to vector<2x32xf32>
    %45 = arith.negf %44 : vector<2x32xf32>
    %46 = math.exp %45 : vector<2x32xf32>
    %cst_15 = arith.constant 1.000000e+00 : f32
    %47 = vector.broadcast %cst_15 : f32 to vector<2x32xf32>
    %48 = arith.addf %47, %46 : vector<2x32xf32>
    %49 = arith.divf %47, %48 : vector<2x32xf32>
    %50 = vector.extract_strided_slice %43 {offsets = [0, 32], sizes = [2, 32], strides = [1, 1]} : vector<2x128xf32> to vector<2x32xf32>
    %51 = arith.negf %50 : vector<2x32xf32>
    %52 = math.exp %51 : vector<2x32xf32>
    %cst_16 = arith.constant 1.000000e+00 : f32
    %53 = vector.broadcast %cst_16 : f32 to vector<2x32xf32>
    %54 = arith.addf %53, %52 : vector<2x32xf32>
    %55 = arith.divf %53, %54 : vector<2x32xf32>
    %56 = vector.extract_strided_slice %43 {offsets = [0, 64], sizes = [2, 32], strides = [1, 1]} : vector<2x128xf32> to vector<2x32xf32>
    %57 = math.tanh %56 : vector<2x32xf32>
    %58 = vector.extract_strided_slice %43 {offsets = [0, 96], sizes = [2, 32], strides = [1, 1]} : vector<2x128xf32> to vector<2x32xf32>
    %59 = arith.negf %58 : vector<2x32xf32>
    %60 = math.exp %59 : vector<2x32xf32>
    %cst_17 = arith.constant 1.000000e+00 : f32
    %61 = vector.broadcast %cst_17 : f32 to vector<2x32xf32>
    %62 = arith.addf %61, %60 : vector<2x32xf32>
    %63 = arith.divf %61, %62 : vector<2x32xf32>
    %64 = arith.mulf %55, %37 : vector<2x32xf32>
    %65 = arith.mulf %49, %57 : vector<2x32xf32>
    %66 = arith.addf %64, %65 : vector<2x32xf32>
    %67 = math.tanh %66 : vector<2x32xf32>
    %68 = arith.mulf %63, %67 : vector<2x32xf32>
    %69 = vector.extract_strided_slice %8 {offsets = [0, 2, 0], sizes = [2, 1, 128], strides = [1, 1, 1]} : vector<2x8x128xf32> to vector<2x1x128xf32>
    %70 = vector.shape_cast %69 : vector<2x1x128xf32> to vector<2x128xf32>
    %cst_18 = arith.constant dense<0.000000e+00> : vector<2x128xf32>
    %71 = tpu.matmul %68, %1, %cst_18 {dimension_numbers = #tpu.dot_dimension_numbers<[1], [0], [0], [1], [0, 0, 1, 1], [], []>} : vector<2x32xf32>, vector<32x128xf32>, vector<2x128xf32> -> vector<2x128xf32>
    %72 = arith.addf %70, %71 : vector<2x128xf32>
    %73 = vector.extract_strided_slice %72 {offsets = [0, 0], sizes = [2, 32], strides = [1, 1]} : vector<2x128xf32> to vector<2x32xf32>
    %74 = arith.negf %73 : vector<2x32xf32>
    %75 = math.exp %74 : vector<2x32xf32>
    %cst_19 = arith.constant 1.000000e+00 : f32
    %76 = vector.broadcast %cst_19 : f32 to vector<2x32xf32>
    %77 = arith.addf %76, %75 : vector<2x32xf32>
    %78 = arith.divf %76, %77 : vector<2x32xf32>
    %79 = vector.extract_strided_slice %72 {offsets = [0, 32], sizes = [2, 32], strides = [1, 1]} : vector<2x128xf32> to vector<2x32xf32>
    %80 = arith.negf %79 : vector<2x32xf32>
    %81 = math.exp %80 : vector<2x32xf32>
    %cst_20 = arith.constant 1.000000e+00 : f32
    %82 = vector.broadcast %cst_20 : f32 to vector<2x32xf32>
    %83 = arith.addf %82, %81 : vector<2x32xf32>
    %84 = arith.divf %82, %83 : vector<2x32xf32>
    %85 = vector.extract_strided_slice %72 {offsets = [0, 64], sizes = [2, 32], strides = [1, 1]} : vector<2x128xf32> to vector<2x32xf32>
    %86 = math.tanh %85 : vector<2x32xf32>
    %87 = vector.extract_strided_slice %72 {offsets = [0, 96], sizes = [2, 32], strides = [1, 1]} : vector<2x128xf32> to vector<2x32xf32>
    %88 = arith.negf %87 : vector<2x32xf32>
    %89 = math.exp %88 : vector<2x32xf32>
    %cst_21 = arith.constant 1.000000e+00 : f32
    %90 = vector.broadcast %cst_21 : f32 to vector<2x32xf32>
    %91 = arith.addf %90, %89 : vector<2x32xf32>
    %92 = arith.divf %90, %91 : vector<2x32xf32>
    %93 = arith.mulf %84, %66 : vector<2x32xf32>
    %94 = arith.mulf %78, %86 : vector<2x32xf32>
    %95 = arith.addf %93, %94 : vector<2x32xf32>
    %96 = math.tanh %95 : vector<2x32xf32>
    %97 = arith.mulf %92, %96 : vector<2x32xf32>
    %98 = vector.extract_strided_slice %8 {offsets = [0, 3, 0], sizes = [2, 1, 128], strides = [1, 1, 1]} : vector<2x8x128xf32> to vector<2x1x128xf32>
    %99 = vector.shape_cast %98 : vector<2x1x128xf32> to vector<2x128xf32>
    %cst_22 = arith.constant dense<0.000000e+00> : vector<2x128xf32>
    %100 = tpu.matmul %97, %1, %cst_22 {dimension_numbers = #tpu.dot_dimension_numbers<[1], [0], [0], [1], [0, 0, 1, 1], [], []>} : vector<2x32xf32>, vector<32x128xf32>, vector<2x128xf32> -> vector<2x128xf32>
    %101 = arith.addf %99, %100 : vector<2x128xf32>
    %102 = vector.extract_strided_slice %101 {offsets = [0, 0], sizes = [2, 32], strides = [1, 1]} : vector<2x128xf32> to vector<2x32xf32>
    %103 = arith.negf %102 : vector<2x32xf32>
    %104 = math.exp %103 : vector<2x32xf32>
    %cst_23 = arith.constant 1.000000e+00 : f32
    %105 = vector.broadcast %cst_23 : f32 to vector<2x32xf32>
    %106 = arith.addf %105, %104 : vector<2x32xf32>
    %107 = arith.divf %105, %106 : vector<2x32xf32>
    %108 = vector.extract_strided_slice %101 {offsets = [0, 32], sizes = [2, 32], strides = [1, 1]} : vector<2x128xf32> to vector<2x32xf32>
    %109 = arith.negf %108 : vector<2x32xf32>
    %110 = math.exp %109 : vector<2x32xf32>
    %cst_24 = arith.constant 1.000000e+00 : f32
    %111 = vector.broadcast %cst_24 : f32 to vector<2x32xf32>
    %112 = arith.addf %111, %110 : vector<2x32xf32>
    %113 = arith.divf %111, %112 : vector<2x32xf32>
    %114 = vector.extract_strided_slice %101 {offsets = [0, 64], sizes = [2, 32], strides = [1, 1]} : vector<2x128xf32> to vector<2x32xf32>
    %115 = math.tanh %114 : vector<2x32xf32>
    %116 = vector.extract_strided_slice %101 {offsets = [0, 96], sizes = [2, 32], strides = [1, 1]} : vector<2x128xf32> to vector<2x32xf32>
    %117 = arith.negf %116 : vector<2x32xf32>
    %118 = math.exp %117 : vector<2x32xf32>
    %cst_25 = arith.constant 1.000000e+00 : f32
    %119 = vector.broadcast %cst_25 : f32 to vector<2x32xf32>
    %120 = arith.addf %119, %118 : vector<2x32xf32>
    %121 = arith.divf %119, %120 : vector<2x32xf32>
    %122 = arith.mulf %113, %95 : vector<2x32xf32>
    %123 = arith.mulf %107, %115 : vector<2x32xf32>
    %124 = arith.addf %122, %123 : vector<2x32xf32>
    %125 = math.tanh %124 : vector<2x32xf32>
    %126 = arith.mulf %121, %125 : vector<2x32xf32>
    %127 = vector.extract_strided_slice %8 {offsets = [0, 4, 0], sizes = [2, 1, 128], strides = [1, 1, 1]} : vector<2x8x128xf32> to vector<2x1x128xf32>
    %128 = vector.shape_cast %127 : vector<2x1x128xf32> to vector<2x128xf32>
    %cst_26 = arith.constant dense<0.000000e+00> : vector<2x128xf32>
    %129 = tpu.matmul %126, %1, %cst_26 {dimension_numbers = #tpu.dot_dimension_numbers<[1], [0], [0], [1], [0, 0, 1, 1], [], []>} : vector<2x32xf32>, vector<32x128xf32>, vector<2x128xf32> -> vector<2x128xf32>
    %130 = arith.addf %128, %129 : vector<2x128xf32>
    %131 = vector.extract_strided_slice %130 {offsets = [0, 0], sizes = [2, 32], strides = [1, 1]} : vector<2x128xf32> to vector<2x32xf32>
    %132 = arith.negf %131 : vector<2x32xf32>
    %133 = math.exp %132 : vector<2x32xf32>
    %cst_27 = arith.constant 1.000000e+00 : f32
    %134 = vector.broadcast %cst_27 : f32 to vector<2x32xf32>
    %135 = arith.addf %134, %133 : vector<2x32xf32>
    %136 = arith.divf %134, %135 : vector<2x32xf32>
    %137 = vector.extract_strided_slice %130 {offsets = [0, 32], sizes = [2, 32], strides = [1, 1]} : vector<2x128xf32> to vector<2x32xf32>
    %138 = arith.negf %137 : vector<2x32xf32>
    %139 = math.exp %138 : vector<2x32xf32>
    %cst_28 = arith.constant 1.000000e+00 : f32
    %140 = vector.broadcast %cst_28 : f32 to vector<2x32xf32>
    %141 = arith.addf %140, %139 : vector<2x32xf32>
    %142 = arith.divf %140, %141 : vector<2x32xf32>
    %143 = vector.extract_strided_slice %130 {offsets = [0, 64], sizes = [2, 32], strides = [1, 1]} : vector<2x128xf32> to vector<2x32xf32>
    %144 = math.tanh %143 : vector<2x32xf32>
    %145 = vector.extract_strided_slice %130 {offsets = [0, 96], sizes = [2, 32], strides = [1, 1]} : vector<2x128xf32> to vector<2x32xf32>
    %146 = arith.negf %145 : vector<2x32xf32>
    %147 = math.exp %146 : vector<2x32xf32>
    %cst_29 = arith.constant 1.000000e+00 : f32
    %148 = vector.broadcast %cst_29 : f32 to vector<2x32xf32>
    %149 = arith.addf %148, %147 : vector<2x32xf32>
    %150 = arith.divf %148, %149 : vector<2x32xf32>
    %151 = arith.mulf %142, %124 : vector<2x32xf32>
    %152 = arith.mulf %136, %144 : vector<2x32xf32>
    %153 = arith.addf %151, %152 : vector<2x32xf32>
    %154 = math.tanh %153 : vector<2x32xf32>
    %155 = arith.mulf %150, %154 : vector<2x32xf32>
    %156 = vector.extract_strided_slice %8 {offsets = [0, 5, 0], sizes = [2, 1, 128], strides = [1, 1, 1]} : vector<2x8x128xf32> to vector<2x1x128xf32>
    %157 = vector.shape_cast %156 : vector<2x1x128xf32> to vector<2x128xf32>
    %cst_30 = arith.constant dense<0.000000e+00> : vector<2x128xf32>
    %158 = tpu.matmul %155, %1, %cst_30 {dimension_numbers = #tpu.dot_dimension_numbers<[1], [0], [0], [1], [0, 0, 1, 1], [], []>} : vector<2x32xf32>, vector<32x128xf32>, vector<2x128xf32> -> vector<2x128xf32>
    %159 = arith.addf %157, %158 : vector<2x128xf32>
    %160 = vector.extract_strided_slice %159 {offsets = [0, 0], sizes = [2, 32], strides = [1, 1]} : vector<2x128xf32> to vector<2x32xf32>
    %161 = arith.negf %160 : vector<2x32xf32>
    %162 = math.exp %161 : vector<2x32xf32>
    %cst_31 = arith.constant 1.000000e+00 : f32
    %163 = vector.broadcast %cst_31 : f32 to vector<2x32xf32>
    %164 = arith.addf %163, %162 : vector<2x32xf32>
    %165 = arith.divf %163, %164 : vector<2x32xf32>
    %166 = vector.extract_strided_slice %159 {offsets = [0, 32], sizes = [2, 32], strides = [1, 1]} : vector<2x128xf32> to vector<2x32xf32>
    %167 = arith.negf %166 : vector<2x32xf32>
    %168 = math.exp %167 : vector<2x32xf32>
    %cst_32 = arith.constant 1.000000e+00 : f32
    %169 = vector.broadcast %cst_32 : f32 to vector<2x32xf32>
    %170 = arith.addf %169, %168 : vector<2x32xf32>
    %171 = arith.divf %169, %170 : vector<2x32xf32>
    %172 = vector.extract_strided_slice %159 {offsets = [0, 64], sizes = [2, 32], strides = [1, 1]} : vector<2x128xf32> to vector<2x32xf32>
    %173 = math.tanh %172 : vector<2x32xf32>
    %174 = vector.extract_strided_slice %159 {offsets = [0, 96], sizes = [2, 32], strides = [1, 1]} : vector<2x128xf32> to vector<2x32xf32>
    %175 = arith.negf %174 : vector<2x32xf32>
    %176 = math.exp %175 : vector<2x32xf32>
    %cst_33 = arith.constant 1.000000e+00 : f32
    %177 = vector.broadcast %cst_33 : f32 to vector<2x32xf32>
    %178 = arith.addf %177, %176 : vector<2x32xf32>
    %179 = arith.divf %177, %178 : vector<2x32xf32>
    %180 = arith.mulf %171, %153 : vector<2x32xf32>
    %181 = arith.mulf %165, %173 : vector<2x32xf32>
    %182 = arith.addf %180, %181 : vector<2x32xf32>
    %183 = math.tanh %182 : vector<2x32xf32>
    %184 = arith.mulf %179, %183 : vector<2x32xf32>
    %185 = vector.extract_strided_slice %8 {offsets = [0, 6, 0], sizes = [2, 1, 128], strides = [1, 1, 1]} : vector<2x8x128xf32> to vector<2x1x128xf32>
    %186 = vector.shape_cast %185 : vector<2x1x128xf32> to vector<2x128xf32>
    %cst_34 = arith.constant dense<0.000000e+00> : vector<2x128xf32>
    %187 = tpu.matmul %184, %1, %cst_34 {dimension_numbers = #tpu.dot_dimension_numbers<[1], [0], [0], [1], [0, 0, 1, 1], [], []>} : vector<2x32xf32>, vector<32x128xf32>, vector<2x128xf32> -> vector<2x128xf32>
    %188 = arith.addf %186, %187 : vector<2x128xf32>
    %189 = vector.extract_strided_slice %188 {offsets = [0, 0], sizes = [2, 32], strides = [1, 1]} : vector<2x128xf32> to vector<2x32xf32>
    %190 = arith.negf %189 : vector<2x32xf32>
    %191 = math.exp %190 : vector<2x32xf32>
    %cst_35 = arith.constant 1.000000e+00 : f32
    %192 = vector.broadcast %cst_35 : f32 to vector<2x32xf32>
    %193 = arith.addf %192, %191 : vector<2x32xf32>
    %194 = arith.divf %192, %193 : vector<2x32xf32>
    %195 = vector.extract_strided_slice %188 {offsets = [0, 32], sizes = [2, 32], strides = [1, 1]} : vector<2x128xf32> to vector<2x32xf32>
    %196 = arith.negf %195 : vector<2x32xf32>
    %197 = math.exp %196 : vector<2x32xf32>
    %cst_36 = arith.constant 1.000000e+00 : f32
    %198 = vector.broadcast %cst_36 : f32 to vector<2x32xf32>
    %199 = arith.addf %198, %197 : vector<2x32xf32>
    %200 = arith.divf %198, %199 : vector<2x32xf32>
    %201 = vector.extract_strided_slice %188 {offsets = [0, 64], sizes = [2, 32], strides = [1, 1]} : vector<2x128xf32> to vector<2x32xf32>
    %202 = math.tanh %201 : vector<2x32xf32>
    %203 = vector.extract_strided_slice %188 {offsets = [0, 96], sizes = [2, 32], strides = [1, 1]} : vector<2x128xf32> to vector<2x32xf32>
    %204 = arith.negf %203 : vector<2x32xf32>
    %205 = math.exp %204 : vector<2x32xf32>
    %cst_37 = arith.constant 1.000000e+00 : f32
    %206 = vector.broadcast %cst_37 : f32 to vector<2x32xf32>
    %207 = arith.addf %206, %205 : vector<2x32xf32>
    %208 = arith.divf %206, %207 : vector<2x32xf32>
    %209 = arith.mulf %200, %182 : vector<2x32xf32>
    %210 = arith.mulf %194, %202 : vector<2x32xf32>
    %211 = arith.addf %209, %210 : vector<2x32xf32>
    %212 = math.tanh %211 : vector<2x32xf32>
    %213 = arith.mulf %208, %212 : vector<2x32xf32>
    %214 = vector.extract_strided_slice %8 {offsets = [0, 7, 0], sizes = [2, 1, 128], strides = [1, 1, 1]} : vector<2x8x128xf32> to vector<2x1x128xf32>
    %215 = vector.shape_cast %214 : vector<2x1x128xf32> to vector<2x128xf32>
    %cst_38 = arith.constant dense<0.000000e+00> : vector<2x128xf32>
    %216 = tpu.matmul %213, %1, %cst_38 {dimension_numbers = #tpu.dot_dimension_numbers<[1], [0], [0], [1], [0, 0, 1, 1], [], []>} : vector<2x32xf32>, vector<32x128xf32>, vector<2x128xf32> -> vector<2x128xf32>
    %217 = arith.addf %215, %216 : vector<2x128xf32>
    %218 = vector.extract_strided_slice %217 {offsets = [0, 0], sizes = [2, 32], strides = [1, 1]} : vector<2x128xf32> to vector<2x32xf32>
    %219 = arith.negf %218 : vector<2x32xf32>
    %220 = math.exp %219 : vector<2x32xf32>
    %cst_39 = arith.constant 1.000000e+00 : f32
    %221 = vector.broadcast %cst_39 : f32 to vector<2x32xf32>
    %222 = arith.addf %221, %220 : vector<2x32xf32>
    %223 = arith.divf %221, %222 : vector<2x32xf32>
    %224 = vector.extract_strided_slice %217 {offsets = [0, 32], sizes = [2, 32], strides = [1, 1]} : vector<2x128xf32> to vector<2x32xf32>
    %225 = arith.negf %224 : vector<2x32xf32>
    %226 = math.exp %225 : vector<2x32xf32>
    %cst_40 = arith.constant 1.000000e+00 : f32
    %227 = vector.broadcast %cst_40 : f32 to vector<2x32xf32>
    %228 = arith.addf %227, %226 : vector<2x32xf32>
    %229 = arith.divf %227, %228 : vector<2x32xf32>
    %230 = vector.extract_strided_slice %217 {offsets = [0, 64], sizes = [2, 32], strides = [1, 1]} : vector<2x128xf32> to vector<2x32xf32>
    %231 = math.tanh %230 : vector<2x32xf32>
    %232 = vector.extract_strided_slice %217 {offsets = [0, 96], sizes = [2, 32], strides = [1, 1]} : vector<2x128xf32> to vector<2x32xf32>
    %233 = arith.negf %232 : vector<2x32xf32>
    %234 = math.exp %233 : vector<2x32xf32>
    %cst_41 = arith.constant 1.000000e+00 : f32
    %235 = vector.broadcast %cst_41 : f32 to vector<2x32xf32>
    %236 = arith.addf %235, %234 : vector<2x32xf32>
    %237 = arith.divf %235, %236 : vector<2x32xf32>
    %238 = arith.mulf %229, %211 : vector<2x32xf32>
    %239 = arith.mulf %223, %231 : vector<2x32xf32>
    %240 = arith.addf %238, %239 : vector<2x32xf32>
    %241 = math.tanh %240 : vector<2x32xf32>
    %242 = arith.mulf %237, %241 : vector<2x32xf32>
    %243 = tpu.concatenate %39, %68, %97, %126, %155, %184, %213, %242 in 1 : vector<2x32xf32>, vector<2x32xf32>, vector<2x32xf32>, vector<2x32xf32>, vector<2x32xf32>, vector<2x32xf32>, vector<2x32xf32>, vector<2x32xf32> -> vector<2x256xf32>
    %c0_42 = arith.constant 0 : index
    %c0_43 = arith.constant 0 : index
    %244 = vector.load %arg4[%c0_42, %c0_43] : memref<256x128xf32, #tpu.memory_space<vmem>>, vector<256x128xf32>
    %cst_44 = arith.constant dense<0.000000e+00> : vector<2x128xf32>
    %245 = tpu.matmul %243, %244, %cst_44 {dimension_numbers = #tpu.dot_dimension_numbers<[1], [0], [0], [1], [0, 0, 1, 1], [], []>} : vector<2x256xf32>, vector<256x128xf32>, vector<2x128xf32> -> vector<2x128xf32>
    %c0_45 = arith.constant 0 : index
    %c0_46 = arith.constant 0 : index
    %246 = vector.load %arg5[%c0_45, %c0_46] : memref<1x128xf32, #tpu.memory_space<vmem>>, vector<1x128xf32>
    %247 = vector.broadcast %246 : vector<1x128xf32> to vector<2x128xf32>
    %248 = arith.addf %245, %247 : vector<2x128xf32>
    %249 = arith.negf %248 : vector<2x128xf32>
    %250 = math.exp %249 : vector<2x128xf32>
    %cst_47 = arith.constant 1.000000e+00 : f32
    %251 = vector.broadcast %cst_47 : f32 to vector<2x128xf32>
    %252 = arith.addf %251, %250 : vector<2x128xf32>
    %253 = arith.divf %251, %252 : vector<2x128xf32>
    %c0_48 = arith.constant 0 : index
    %c0_49 = arith.constant 0 : index
    %254 = vector.load %arg6[%c0_48, %c0_49] : memref<2x128xf32, #tpu.memory_space<vmem>>, vector<2x128xf32>
    tpu.vector_store %arg6[%c0_48, %c0_49], %253 {strides = array<i32>} : memref<2x128xf32, #tpu.memory_space<vmem>>, vector<2x128xf32>,
    return
  }
}

</mosaic_0001>

<llo_original>
// kernel: tpu_custom_call.1
$region0: #{tpu_custom_call.1}
  #allocation0 [shape = 'u32[]', space=smem, size = 0x4, offset = 0x4, fixed_abs, tag = 'smem constant byte address 0x4 - core index']
  #allocation1 [shape = 'u32[144,128]{1,0:T(1,128)}', space=vmem, size = 0x12000, scoped, tag = 'internal scratch']
  %s0 = inlined_call_operand.hbm [shape: f32[2,8,8], index: 0, kind: input, shape index: {}]
  %s1 = inlined_call_operand.hbm [shape: f32[8,128], index: 1, kind: input, shape index: {}]
  %s2 = inlined_call_operand.hbm [shape: f32[32,128], index: 2, kind: input, shape index: {}]
  %s3 = inlined_call_operand.vmem [shape: f32[1,128], index: 3, kind: input, shape index: {}]
  %s4 = inlined_call_operand.hbm [shape: f32[256,128], index: 4, kind: input, shape index: {}]
  %s5 = inlined_call_operand.vmem [shape: f32[1,128], index: 5, kind: input, shape index: {}]
  %s6 = inlined_call_operand.hbm [shape: f32[2,128], index: 6, kind: output, shape index: {}]
  %s7 = sld [smem:[#allocation0]]
  $region50: #{tpu_custom_call.1} parent=0
    _
  %s9 = ssub.s32 1, %s7
  %s10 = scalar_select 0, %s9, %s7
  $region1: #{tpu_custom_call.1} parent=0
    #allocation2 [shape = 'u8[8192]{0}', space=vmem, size = 0x2000, scoped, tag = 'input window, operand 0, single buffered']
    #allocation3 [shape = 's32[1]{0}', space=sflag, size = 0x4, scoped, tag = 'scoped memory for tpu_custom_call.1']
    #allocation4 [shape = 's32[1]{0}', space=sflag, size = 0x4, scoped, tag = 'scoped memory for tpu_custom_call.1']
    #allocation5 [shape = 'u8[4096]{0}', space=vmem, size = 0x1000, scoped, tag = 'input window, operand 1, single buffered']
    #allocation6 [shape = 's32[1]{0}', space=sflag, size = 0x4, scoped, tag = 'scoped memory for tpu_custom_call.1']
    #allocation7 [shape = 'u8[16384]{0}', space=vmem, size = 0x4000, scoped, tag = 'input window, operand 2, single buffered']
    #allocation8 [shape = 'u8[131072]{0}', space=vmem, size = 0x20000, scoped, tag = 'input window, operand 4, single buffered']
    #allocation9 [shape = 's32[1]{0}', space=sflag, size = 0x4, scoped, tag = 'scoped memory for tpu_custom_call.1']
    #allocation10 [shape = 'u8[1024]{0}', space=vmem, size = 0x400, scoped, tag = 'output window, operand 0, single buffered']
    %11 = vsyncpa [#allocation3], 0
    %12 = vsyncpa [#allocation6], 0
    %13 = vsyncpa [#allocation9], 0
    %14 = vsyncpa [#allocation4], 0
    // Predicated region
    $region2: #{tpu_custom_call.1} parent=1 // pred_check
      _
    $region3: #{tpu_custom_call.1} parent=1 // pred_check_branch
      %16 = sbr.rel (0) target = $region5
    $region4: #{tpu_custom_call.1} parent=1 // pred_region
      %s18 = ssub.s32 256, 256
      %19 = vsyncadd [#allocation3], %s18
      %s20 = sshll.u32 [#allocation2], 4
      %s21 = int_to_ptr.vmem [resolvable:$true] %s20
      %26 = dma.hbm_to_vmem [thread:$0]  %s0, 256, %s21, [#allocation3], 128, 128, 8
    $region5: #{tpu_custom_call.1} parent=1 // pred_fallthru
      _
    // Predicated region
    $region6: #{tpu_custom_call.1} parent=1 // pred_check
      _
    $region7: #{tpu_custom_call.1} parent=1 // pred_check_branch
      %28 = sbr.rel (0) target = $region9
    $region8: #{tpu_custom_call.1} parent=1 // pred_region
      %s30 = ssub.s32 128, 128
      %31 = vsyncadd [#allocation6], %s30
      %s33 = sshll.u32 [#allocation5], 4
      %s34 = int_to_ptr.vmem [resolvable:$true] %s33
      %36 = dma.hbm_to_vmem [thread:$0]  %s1, 128, %s34, [#allocation6]
    $region9: #{tpu_custom_call.1} parent=1 // pred_fallthru
      _
    // Predicated region
    $region10: #{tpu_custom_call.1} parent=1 // pred_check
      _
    $region11: #{tpu_custom_call.1} parent=1 // pred_check_branch
      %38 = sbr.rel (0) target = $region13
    $region12: #{tpu_custom_call.1} parent=1 // pred_region
      %s40 = ssub.s32 512, 512
      %41 = vsyncadd [#allocation6], %s40
      %s42 = sshll.u32 [#allocation7], 4
      %s43 = int_to_ptr.vmem [resolvable:$true] %s42
      %48 = dma.hbm_to_vmem [thread:$0]  %s2, 512, %s43, [#allocation6], 128, 128, 8
    $region13: #{tpu_custom_call.1} parent=1 // pred_fallthru
      _
    // Predicated region
    $region14: #{tpu_custom_call.1} parent=1 // pred_check
      _
    $region15: #{tpu_custom_call.1} parent=1 // pred_check_branch
      %50 = sbr.rel (0) target = $region17
    $region16: #{tpu_custom_call.1} parent=1 // pred_region
      _
    $region17: #{tpu_custom_call.1} parent=1 // pred_fallthru
      _
    // Predicated region
    $region18: #{tpu_custom_call.1} parent=1 // pred_check
      _
    $region19: #{tpu_custom_call.1} parent=1 // pred_check_branch
      %52 = sbr.rel (0) target = $region21
    $region20: #{tpu_custom_call.1} parent=1 // pred_region
      %s54 = ssub.s32 4096, 4096
      %55 = vsyncadd [#allocation9], %s54
      %s56 = sshll.u32 [#allocation8], 4
      %s57 = int_to_ptr.vmem [resolvable:$true] %s56
      %62 = dma.hbm_to_vmem [thread:$0]  %s4, 4096, %s57, [#allocation9], 128, 128, 8
    $region21: #{tpu_custom_call.1} parent=1 // pred_fallthru
      _
    // Predicated region
    $region22: #{tpu_custom_call.1} parent=1 // pred_check
      _
    $region23: #{tpu_custom_call.1} parent=1 // pred_check_branch
      %64 = sbr.rel (0) target = $region25
    $region24: #{tpu_custom_call.1} parent=1 // pred_region
      _
    $region25: #{tpu_custom_call.1} parent=1 // pred_fallthru
      _
    // Predicated region
    $region26: #{tpu_custom_call.1} parent=1 // pred_check
      _
    $region27: #{tpu_custom_call.1} parent=1 // pred_check_branch
      %66 = sbr.rel (0) target = $region29
    $region28: #{tpu_custom_call.1} parent=1 // pred_region
      %67 = dma.done [#allocation3], 256
    $region29: #{tpu_custom_call.1} parent=1 // pred_fallthru
      _
    // Predicated region
    $region30: #{tpu_custom_call.1} parent=1 // pred_check
      _
    $region31: #{tpu_custom_call.1} parent=1 // pred_check_branch
      %69 = sbr.rel (0) target = $region33
    $region32: #{tpu_custom_call.1} parent=1 // pred_region
      %70 = dma.done [#allocation6], 128
    $region33: #{tpu_custom_call.1} parent=1 // pred_fallthru
      _
    // Predicated region
    $region34: #{tpu_custom_call.1} parent=1 // pred_check
      _
    $region35: #{tpu_custom_call.1} parent=1 // pred_check_branch
      %72 = sbr.rel (0) target = $region37
    $region36: #{tpu_custom_call.1} parent=1 // pred_region
      %73 = dma.done [#allocation6], 512
    $region37: #{tpu_custom_call.1} parent=1 // pred_fallthru
      _
    // Predicated region
    $region38: #{tpu_custom_call.1} parent=1 // pred_check
      _
    $region39: #{tpu_custom_call.1} parent=1 // pred_check_branch
      %75 = sbr.rel (0) target = $region41
    $region40: #{tpu_custom_call.1} parent=1 // pred_region
      %76 = dma.done [#allocation9], 4096
    $region41: #{tpu_custom_call.1} parent=1 // pred_fallthru
      _
    %v77 = vld [vmem:[#allocation5] sm:$0xff]
    %v78 = vld [vmem:[#allocation7] sm:$0xff]
    %v79 = vld [vmem:[#allocation7 + $0x8] sm:$0xff]
    %v80 = vld [vmem:[#allocation7 + $0x10] sm:$0xff]
    %v81 = vld [vmem:[#allocation7 + $0x18] sm:$0xff]
    %v82 = vld [vmem:[%s3] sm:$0x1]
    %v83 = vld [vmem:[#allocation2] sm:$0xff]
    %v84 = vld [vmem:[#allocation2 + $0x8] sm:$0xff]
    %v86 = vlaneseq
    %v87 = vshrl.u32 %v86, 7
    %v88 = vsub.s32 0, %v87
    %v89 = vrot.slane %v82, %v88
    %vm91 = vcmask 64512
    %v93 = vsel %vm91, %v83, 0
    %v96 = vsel %vm91, %v84, 0
    %98 = vmatprep.subr.mxu0 0.0
    %99 = vmatpush1.msra.mxu0 0.0
    %100 = vmatprep.subr.mxu0 0.0
    %101 = vmatpush1.msra.mxu0 0.0
    %102 = vmatprep.subr.mxu0 0.0
    %103 = vmatpush1.msra.mxu0 0.0
    %104 = vmatprep.subr.mxu0 0.0
    %105 = vmatpush1.msra.mxu0 0.0
    %106 = vmatprep.subr.mxu0 0.0
    %107 = vmatpush1.msra.mxu0 0.0
    %108 = vmatprep.subr.mxu0 0.0
    %109 = vmatpush1.msra.mxu0 0.0
    %110 = vmatprep.subr.mxu0 0.0
    %111 = vmatpush1.msra.mxu0 0.0
    %112 = vmatprep.subr.mxu0 0.0
    %113 = vmatpush1.msra.mxu0 0.0
    %114 = vmatprep.subr.mxu0 0.0
    %115 = vmatpush1.msra.mxu0 0.0
    %116 = vmatprep.subr.mxu0 0.0
    %117 = vmatpush1.msra.mxu0 0.0
    %118 = vmatprep.subr.mxu0 0.0
    %119 = vmatpush1.msra.mxu0 0.0
    %120 = vmatprep.subr.mxu0 0.0
    %121 = vmatpush1.msra.mxu0 0.0
    %122 = vmatprep.subr.mxu0 0.0
    %123 = vmatpush1.msra.mxu0 0.0
    %124 = vmatprep.subr.mxu0 0.0
    %125 = vmatpush1.msra.mxu0 0.0
    %126 = vmatprep.subr.mxu0 0.0
    %127 = vmatpush1.msra.mxu0 0.0
    %128 = vmatprep.subr.mxu0 0.0
    %129 = vmatpush1.msra.mxu0 %v77
    %130 = vmatprep.subr.mxu0 0.0
    %131 = vmatpush2.msra.mxu0 0.0
    %132 = vmatprep.subr.mxu0 0.0
    %133 = vmatpush2.msra.mxu0 0.0
    %134 = vmatprep.subr.mxu0 0.0
    %135 = vmatpush2.msra.mxu0 0.0
    %136 = vmatprep.subr.mxu0 0.0
    %137 = vmatpush2.msra.mxu0 0.0
    %138 = vmatprep.subr.mxu0 0.0
    %139 = vmatpush2.msra.mxu0 0.0
    %140 = vmatprep.subr.mxu0 0.0
    %141 = vmatpush2.msra.mxu0 0.0
    %142 = vmatprep.subr.mxu0 0.0
    %143 = vmatpush2.msra.mxu0 0.0
    %144 = vmatprep.subr.mxu0 0.0
    %145 = vmatpush2.msra.mxu0 0.0
    %146 = vmatprep.subr.mxu0 0.0
    %147 = vmatpush2.msra.mxu0 0.0
    %148 = vmatprep.subr.mxu0 0.0
    %149 = vmatpush2.msra.mxu0 0.0
    %150 = vmatprep.subr.mxu0 0.0
    %151 = vmatpush2.msra.mxu0 0.0
    %152 = vmatprep.subr.mxu0 0.0
    %153 = vmatpush2.msra.mxu0 0.0
    %154 = vmatprep.subr.mxu0 0.0
    %155 = vmatpush2.msra.mxu0 0.0
    %156 = vmatprep.subr.mxu0 0.0
    %157 = vmatpush2.msra.mxu0 0.0
    %158 = vmatprep.subr.mxu0 0.0
    %159 = vmatpush2.msra.mxu0 0.0
    %160 = vmatprep.subr.mxu0 0.0
    %161 = vmatpush2.msra.mxu0 0.0
    %162 = vmatprep.mubr.f32.mxu0 0.0
    %163 = vmatmul.mubr.f32.gmra.mxu0 %v93
    %v164 = vpop.f32.mrf.mxu0
    %v165 = vadd.f32 %v89, %v164
    %v166 = vpop.f32.mrf.mxu0
    %167 = vmatprep.mubr.f32.mxu0 0.0
    %168 = vmatmul.mubr.f32.gmra.mxu0 %v96
    %v169 = vpop.f32.mrf.mxu0
    %v170 = vadd.f32 %v89, %v169
    %v171 = vpop.f32.mrf.mxu0
    %172 = vdwg.mxu0
    %vm173 = vcmask 261120
    %v175 = vsel %vm173, 0.0, 0
    %177 = vmatprep.subr.mxu0 0.0
    %178 = vmatpush1.msra.mxu0 0.0
    %179 = vmatprep.subr.mxu0 0.0
    %180 = vmatpush1.msra.mxu0 0.0
    %181 = vmatprep.subr.mxu0 0.0
    %182 = vmatpush1.msra.mxu0 0.0
    %183 = vmatprep.subr.mxu0 0.0
    %184 = vmatpush1.msra.mxu0 0.0
    %185 = vmatprep.subr.mxu0 0.0
    %186 = vmatpush1.msra.mxu0 0.0
    %187 = vmatprep.subr.mxu0 0.0
    %188 = vmatpush1.msra.mxu0 0.0
    %189 = vmatprep.subr.mxu0 0.0
    %190 = vmatpush1.msra.mxu0 0.0
    %191 = vmatprep.subr.mxu0 0.0
    %192 = vmatpush1.msra.mxu0 0.0
    %193 = vmatprep.subr.mxu0 0.0
    %194 = vmatpush1.msra.mxu0 0.0
    %195 = vmatprep.subr.mxu0 0.0
    %196 = vmatpush1.msra.mxu0 0.0
    %197 = vmatprep.subr.mxu0 0.0
    %198 = vmatpush1.msra.mxu0 0.0
    %199 = vmatprep.subr.mxu0 0.0
    %200 = vmatpush1.msra.mxu0 0.0
    %201 = vmatprep.subr.mxu0 0.0
    %202 = vmatpush1.msra.mxu0 %v81
    %203 = vmatprep.subr.mxu0 0.0
    %204 = vmatpush1.msra.mxu0 %v80
    %205 = vmatprep.subr.mxu0 0.0
    %206 = vmatpush1.msra.mxu0 %v79
    %207 = vmatprep.subr.mxu0 0.0
    %208 = vmatpush1.msra.mxu0 %v78
    %209 = vmatprep.subr.mxu0 0.0
    %210 = vmatpush2.msra.mxu0 0.0
    %211 = vmatprep.subr.mxu0 0.0
    %212 = vmatpush2.msra.mxu0 0.0
    %213 = vmatprep.subr.mxu0 0.0
    %214 = vmatpush2.msra.mxu0 0.0
    %215 = vmatprep.subr.mxu0 0.0
    %216 = vmatpush2.msra.mxu0 0.0
    %217 = vmatprep.subr.mxu0 0.0
    %218 = vmatpush2.msra.mxu0 0.0
    %219 = vmatprep.subr.mxu0 0.0
    %220 = vmatpush2.msra.mxu0 0.0
    %221 = vmatprep.subr.mxu0 0.0
    %222 = vmatpush2.msra.mxu0 0.0
    %223 = vmatprep.subr.mxu0 0.0
    %224 = vmatpush2.msra.mxu0 0.0
    %225 = vmatprep.subr.mxu0 0.0
    %226 = vmatpush2.msra.mxu0 0.0
    %227 = vmatprep.subr.mxu0 0.0
    %228 = vmatpush2.msra.mxu0 0.0
    %229 = vmatprep.subr.mxu0 0.0
    %230 = vmatpush2.msra.mxu0 0.0
    %231 = vmatprep.subr.mxu0 0.0
    %232 = vmatpush2.msra.mxu0 0.0
    %233 = vmatprep.subr.mxu0 0.0
    %234 = vmatpush2.msra.mxu0 0.0
    %235 = vmatprep.subr.mxu0 0.0
    %236 = vmatpush2.msra.mxu0 0.0
    %237 = vmatprep.subr.mxu0 0.0
    %238 = vmatpush2.msra.mxu0 0.0
    %239 = vmatprep.subr.mxu0 0.0
    %240 = vmatpush2.msra.mxu0 0.0
    %241 = vmatprep.mubr.f32.mxu0 0.0
    %242 = vmatmul.mubr.f32.gmra.mxu0 %v175
    %v243 = vpop.f32.mrf.mxu0
    %v244 = vadd.f32 0.0, %v243
    %v245 = vpop.f32.mrf.mxu0
    %246 = vdwg.mxu0
    %v248 = vrot.slane %v244, 1
    %v251 = vadd.f32 %v165, %v244
    %v252 = vadd.f32 %v170, %v248
    %v253 = vxor.u32 %v251, 2147483648
    %v254 = vxor.u32 %v252, 2147483648
    %v255 = vmul.f32 %v253, 1.442695
    %v256 = vpow.pop %v255
    %v257 = vmul.f32 %v254, 1.442695
    %v258 = vpow.pop %v257
    %v259 = vadd.f32 %v256, 1.0
    %v260 = vadd.f32 %v258, 1.0
    %v261 = vrcp.pop %v259
    %v262 = vmul.f32 1.0, %v261
    %v263 = vrcp.pop %v260
    %v264 = vmul.f32 1.0, %v263
    %v265 = vtanh.pop %v251
    %v266 = vtanh.pop %v252
    %v267 = vmul.f32 %v262, 0.0
    %v268 = vmul.f32 %v264, 0.0
    %271 = vrot.lane.b32.xlu0 %v265, 64
    %v272 = vpop.permute.xlu0 %271
    %273 = vrot.lane.b32.xlu0 %v266, 64
    %v274 = vpop.permute.xlu0 %273
    %v277 = vmul.f32 %v262, %v272
    %v278 = vmul.f32 %v264, %v274
    %281 = vrot.lane.b32.xlu0 %v277, 32
    %v282 = vpop.permute.xlu0 %281
    %283 = vrot.lane.b32.xlu0 %v278, 32
    %v284 = vpop.permute.xlu0 %283
    %v287 = vadd.f32 %v267, %v282
    %v288 = vadd.f32 %v268, %v284
    %v289 = vtanh.pop %v287
    %v290 = vtanh.pop %v288
    %293 = vrot.lane.b32.xlu0 %v289, 64
    %v294 = vpop.permute.xlu0 %293
    %295 = vrot.lane.b32.xlu0 %v290, 64
    %v296 = vpop.permute.xlu0 %295
    %v299 = vmul.f32 %v262, %v294
    %v300 = vmul.f32 %v264, %v296
    %v303 = vrot.slane %v300, 7
    %vm304 = vcmask 1041409
    %v305 = vsel %vm304, %v303, %v299
    %306 = vrot.lane.b32.xlu0 %v305, 32
    %v307 = vpop.permute.xlu0 %306
    %v308 = vsel %vm173, %v307, 0
    %310 = vmatprep.subr.mxu0 0.0
    %311 = vmatpush1.msra.mxu0 0.0
    %312 = vmatprep.subr.mxu0 0.0
    %313 = vmatpush1.msra.mxu0 0.0
    %314 = vmatprep.subr.mxu0 0.0
    %315 = vmatpush1.msra.mxu0 0.0
    %316 = vmatprep.subr.mxu0 0.0
    %317 = vmatpush1.msra.mxu0 0.0
    %318 = vmatprep.subr.mxu0 0.0
    %319 = vmatpush1.msra.mxu0 0.0
    %320 = vmatprep.subr.mxu0 0.0
    %321 = vmatpush1.msra.mxu0 0.0
    %322 = vmatprep.subr.mxu0 0.0
    %323 = vmatpush1.msra.mxu0 0.0
    %324 = vmatprep.subr.mxu0 0.0
    %325 = vmatpush1.msra.mxu0 0.0
    %326 = vmatprep.subr.mxu0 0.0
    %327 = vmatpush1.msra.mxu0 0.0
    %328 = vmatprep.subr.mxu0 0.0
    %329 = vmatpush1.msra.mxu0 0.0
    %330 = vmatprep.subr.mxu0 0.0
    %331 = vmatpush1.msra.mxu0 0.0
    %332 = vmatprep.subr.mxu0 0.0
    %333 = vmatpush1.msra.mxu0 0.0
    %334 = vmatprep.subr.mxu0 0.0
    %335 = vmatpush1.msra.mxu0 %v81
    %336 = vmatprep.subr.mxu0 0.0
    %337 = vmatpush1.msra.mxu0 %v80
    %338 = vmatprep.subr.mxu0 0.0
    %339 = vmatpush1.msra.mxu0 %v79
    %340 = vmatprep.subr.mxu0 0.0
    %341 = vmatpush1.msra.mxu0 %v78
    %342 = vmatprep.subr.mxu0 0.0
    %343 = vmatpush2.msra.mxu0 0.0
    %344 = vmatprep.subr.mxu0 0.0
    %345 = vmatpush2.msra.mxu0 0.0
    %346 = vmatprep.subr.mxu0 0.0
    %347 = vmatpush2.msra.mxu0 0.0
    %348 = vmatprep.subr.mxu0 0.0
    %349 = vmatpush2.msra.mxu0 0.0
    %350 = vmatprep.subr.mxu0 0.0
    %351 = vmatpush2.msra.mxu0 0.0
    %352 = vmatprep.subr.mxu0 0.0
    %353 = vmatpush2.msra.mxu0 0.0
    %354 = vmatprep.subr.mxu0 0.0
    %355 = vmatpush2.msra.mxu0 0.0
    %356 = vmatprep.subr.mxu0 0.0
    %357 = vmatpush2.msra.mxu0 0.0
    %358 = vmatprep.subr.mxu0 0.0
    %359 = vmatpush2.msra.mxu0 0.0
    %360 = vmatprep.subr.mxu0 0.0
    %361 = vmatpush2.msra.mxu0 0.0
    %362 = vmatprep.subr.mxu0 0.0
    %363 = vmatpush2.msra.mxu0 0.0
    %364 = vmatprep.subr.mxu0 0.0
    %365 = vmatpush2.msra.mxu0 0.0
    %366 = vmatprep.subr.mxu0 0.0
    %367 = vmatpush2.msra.mxu0 0.0
    %368 = vmatprep.subr.mxu0 0.0
    %369 = vmatpush2.msra.mxu0 0.0
    %370 = vmatprep.subr.mxu0 0.0
    %371 = vmatpush2.msra.mxu0 0.0
    %372 = vmatprep.subr.mxu0 0.0
    %373 = vmatpush2.msra.mxu0 0.0
    %374 = vmatprep.mubr.f32.mxu0 0.0
    %375 = vmatmul.mubr.f32.gmra.mxu0 %v308
    %v376 = vpop.f32.mrf.mxu0
    %v377 = vadd.f32 0.0, %v376
    %v378 = vpop.f32.mrf.mxu0
    %379 = vdwg.mxu0
    %v381 = vrot.slane %v377, 7
    %v384 = vadd.f32 %v165, %v381
    %v385 = vadd.f32 %v170, %v377
    %v386 = vxor.u32 %v384, 2147483648
    %v387 = vxor.u32 %v385, 2147483648
    %v388 = vmul.f32 %v386, 1.442695
    %v389 = vpow.pop %v388
    %v390 = vmul.f32 %v387, 1.442695
    %v391 = vpow.pop %v390
    %v392 = vadd.f32 %v389, 1.0
    %v393 = vadd.f32 %v391, 1.0
    %v394 = vrcp.pop %v392
    %v395 = vmul.f32 1.0, %v394
    %v396 = vrcp.pop %v393
    %v397 = vmul.f32 1.0, %v396
    %v398 = vtanh.pop %v384
    %v399 = vtanh.pop %v385
    %v402 = vrot.slane %v287, 7
    %v403 = vrot.slane %v288, 7
    %v406 = vmul.f32 %v395, %v402
    %v407 = vmul.f32 %v397, %v403
    %410 = vrot.lane.b32.xlu0 %v398, 64
    %v411 = vpop.permute.xlu0 %410
    %412 = vrot.lane.b32.xlu0 %v399, 64
    %v413 = vpop.permute.xlu0 %412
    %v416 = vmul.f32 %v395, %v411
    %v417 = vmul.f32 %v397, %v413
    %420 = vrot.lane.b32.xlu0 %v416, 32
    %v421 = vpop.permute.xlu0 %420
    %422 = vrot.lane.b32.xlu0 %v417, 32
    %v423 = vpop.permute.xlu0 %422
    %v426 = vadd.f32 %v406, %v421
    %v427 = vadd.f32 %v407, %v423
    %v428 = vtanh.pop %v426
    %v429 = vtanh.pop %v427
    %432 = vrot.lane.b32.xlu0 %v428, 64
    %v433 = vpop.permute.xlu0 %432
    %434 = vrot.lane.b32.xlu0 %v429, 64
    %v435 = vpop.permute.xlu0 %434
    %v438 = vmul.f32 %v395, %v433
    %v439 = vmul.f32 %v397, %v435
    %v442 = vrot.slane %v438, 1
    %v443 = vsel %vm304, %v439, %v442
    %444 = vrot.lane.b32.xlu0 %v443, 32
    %v445 = vpop.permute.xlu0 %444
    %v446 = vsel %vm173, %v445, 0
    %448 = vmatprep.subr.mxu0 0.0
    %449 = vmatpush1.msra.mxu0 0.0
    %450 = vmatprep.subr.mxu0 0.0
    %451 = vmatpush1.msra.mxu0 0.0
    %452 = vmatprep.subr.mxu0 0.0
    %453 = vmatpush1.msra.mxu0 0.0
    %454 = vmatprep.subr.mxu0 0.0
    %455 = vmatpush1.msra.mxu0 0.0
    %456 = vmatprep.subr.mxu0 0.0
    %457 = vmatpush1.msra.mxu0 0.0
    %458 = vmatprep.subr.mxu0 0.0
    %459 = vmatpush1.msra.mxu0 0.0
    %460 = vmatprep.subr.mxu0 0.0
    %461 = vmatpush1.msra.mxu0 0.0
    %462 = vmatprep.subr.mxu0 0.0
    %463 = vmatpush1.msra.mxu0 0.0
    %464 = vmatprep.subr.mxu0 0.0
    %465 = vmatpush1.msra.mxu0 0.0
    %466 = vmatprep.subr.mxu0 0.0
    %467 = vmatpush1.msra.mxu0 0.0
    %468 = vmatprep.subr.mxu0 0.0
    %469 = vmatpush1.msra.mxu0 0.0
    %470 = vmatprep.subr.mxu0 0.0
    %471 = vmatpush1.msra.mxu0 0.0
    %472 = vmatprep.subr.mxu0 0.0
    %473 = vmatpush1.msra.mxu0 %v81
    %474 = vmatprep.subr.mxu0 0.0
    %475 = vmatpush1.msra.mxu0 %v80
    %476 = vmatprep.subr.mxu0 0.0
    %477 = vmatpush1.msra.mxu0 %v79
    %478 = vmatprep.subr.mxu0 0.0
    %479 = vmatpush1.msra.mxu0 %v78
    %480 = vmatprep.subr.mxu0 0.0
    %481 = vmatpush2.msra.mxu0 0.0
    %482 = vmatprep.subr.mxu0 0.0
    %483 = vmatpush2.msra.mxu0 0.0
    %484 = vmatprep.subr.mxu0 0.0
    %485 = vmatpush2.msra.mxu0 0.0
    %486 = vmatprep.subr.mxu0 0.0
    %487 = vmatpush2.msra.mxu0 0.0
    %488 = vmatprep.subr.mxu0 0.0
    %489 = vmatpush2.msra.mxu0 0.0
    %490 = vmatprep.subr.mxu0 0.0
    %491 = vmatpush2.msra.mxu0 0.0
    %492 = vmatprep.subr.mxu0 0.0
    %493 = vmatpush2.msra.mxu0 0.0
    %494 = vmatprep.subr.mxu0 0.0
    %495 = vmatpush2.msra.mxu0 0.0
    %496 = vmatprep.subr.mxu0 0.0
    %497 = vmatpush2.msra.mxu0 0.0
    %498 = vmatprep.subr.mxu0 0.0
    %499 = vmatpush2.msra.mxu0 0.0
    %500 = vmatprep.subr.mxu0 0.0
    %501 = vmatpush2.msra.mxu0 0.0
    %502 = vmatprep.subr.mxu0 0.0
    %503 = vmatpush2.msra.mxu0 0.0
    %504 = vmatprep.subr.mxu0 0.0
    %505 = vmatpush2.msra.mxu0 0.0
    %506 = vmatprep.subr.mxu0 0.0
    %507 = vmatpush2.msra.mxu0 0.0
    %508 = vmatprep.subr.mxu0 0.0
    %509 = vmatpush2.msra.mxu0 0.0
    %510 = vmatprep.subr.mxu0 0.0
    %511 = vmatpush2.msra.mxu0 0.0
    %512 = vmatprep.mubr.f32.mxu0 0.0
    %513 = vmatmul.mubr.f32.gmra.mxu0 %v446
    %v514 = vpop.f32.mrf.mxu0
    %v515 = vadd.f32 0.0, %v514
    %v516 = vpop.f32.mrf.mxu0
    %517 = vdwg.mxu0
    %v519 = vrot.slane %v515, 6
    %v520 = vrot.slane %v515, 7
    %v523 = vadd.f32 %v165, %v519
    %v524 = vadd.f32 %v170, %v520
    %v525 = vxor.u32 %v523, 2147483648
    %v526 = vxor.u32 %v524, 2147483648
    %v527 = vmul.f32 %v525, 1.442695
    %v528 = vpow.pop %v527
    %v529 = vmul.f32 %v526, 1.442695
    %v530 = vpow.pop %v529
    %v531 = vadd.f32 %v528, 1.0
    %v532 = vadd.f32 %v530, 1.0
    %v533 = vrcp.pop %v531
    %v534 = vmul.f32 1.0, %v533
    %v535 = vrcp.pop %v532
    %v536 = vmul.f32 1.0, %v535
    %v537 = vtanh.pop %v523
    %v538 = vtanh.pop %v524
    %v541 = vrot.slane %v426, 7
    %v542 = vrot.slane %v427, 7
    %v545 = vmul.f32 %v534, %v541
    %v546 = vmul.f32 %v536, %v542
    %549 = vrot.lane.b32.xlu0 %v537, 64
    %v550 = vpop.permute.xlu0 %549
    %551 = vrot.lane.b32.xlu0 %v538, 64
    %v552 = vpop.permute.xlu0 %551
    %v555 = vmul.f32 %v534, %v550
    %v556 = vmul.f32 %v536, %v552
    %559 = vrot.lane.b32.xlu0 %v555, 32
    %v560 = vpop.permute.xlu0 %559
    %561 = vrot.lane.b32.xlu0 %v556, 32
    %v562 = vpop.permute.xlu0 %561
    %v565 = vadd.f32 %v545, %v560
    %v566 = vadd.f32 %v546, %v562
    %v567 = vtanh.pop %v565
    %v568 = vtanh.pop %v566
    %571 = vrot.lane.b32.xlu0 %v567, 64
    %v572 = vpop.permute.xlu0 %571
    %573 = vrot.lane.b32.xlu0 %v568, 64
    %v574 = vpop.permute.xlu0 %573
    %v577 = vmul.f32 %v534, %v572
    %v578 = vmul.f32 %v536, %v574
    %v581 = vrot.slane %v577, 2
    %v582 = vrot.slane %v578, 1
    %v583 = vsel %vm304, %v582, %v581
    %584 = vrot.lane.b32.xlu0 %v583, 32
    %v585 = vpop.permute.xlu0 %584
    %v586 = vsel %vm173, %v585, 0
    %588 = vmatprep.subr.mxu0 0.0
    %589 = vmatpush1.msra.mxu0 0.0
    %590 = vmatprep.subr.mxu0 0.0
    %591 = vmatpush1.msra.mxu0 0.0
    %592 = vmatprep.subr.mxu0 0.0
    %593 = vmatpush1.msra.mxu0 0.0
    %594 = vmatprep.subr.mxu0 0.0
    %595 = vmatpush1.msra.mxu0 0.0
    %596 = vmatprep.subr.mxu0 0.0
    %597 = vmatpush1.msra.mxu0 0.0
    %598 = vmatprep.subr.mxu0 0.0
    %599 = vmatpush1.msra.mxu0 0.0
    %600 = vmatprep.subr.mxu0 0.0
    %601 = vmatpush1.msra.mxu0 0.0
    %602 = vmatprep.subr.mxu0 0.0
    %603 = vmatpush1.msra.mxu0 0.0
    %604 = vmatprep.subr.mxu0 0.0
    %605 = vmatpush1.msra.mxu0 0.0
    %606 = vmatprep.subr.mxu0 0.0
    %607 = vmatpush1.msra.mxu0 0.0
    %608 = vmatprep.subr.mxu0 0.0
    %609 = vmatpush1.msra.mxu0 0.0
    %610 = vmatprep.subr.mxu0 0.0
    %611 = vmatpush1.msra.mxu0 0.0
    %612 = vmatprep.subr.mxu0 0.0
    %613 = vmatpush1.msra.mxu0 %v81
    %614 = vmatprep.subr.mxu0 0.0
    %615 = vmatpush1.msra.mxu0 %v80
    %616 = vmatprep.subr.mxu0 0.0
    %617 = vmatpush1.msra.mxu0 %v79
    %618 = vmatprep.subr.mxu0 0.0
    %619 = vmatpush1.msra.mxu0 %v78
    %620 = vmatprep.subr.mxu0 0.0
    %621 = vmatpush2.msra.mxu0 0.0
    %622 = vmatprep.subr.mxu0 0.0
    %623 = vmatpush2.msra.mxu0 0.0
    %624 = vmatprep.subr.mxu0 0.0
    %625 = vmatpush2.msra.mxu0 0.0
    %626 = vmatprep.subr.mxu0 0.0
    %627 = vmatpush2.msra.mxu0 0.0
    %628 = vmatprep.subr.mxu0 0.0
    %629 = vmatpush2.msra.mxu0 0.0
    %630 = vmatprep.subr.mxu0 0.0
    %631 = vmatpush2.msra.mxu0 0.0
    %632 = vmatprep.subr.mxu0 0.0
    %633 = vmatpush2.msra.mxu0 0.0
    %634 = vmatprep.subr.mxu0 0.0
    %635 = vmatpush2.msra.mxu0 0.0
    %636 = vmatprep.subr.mxu0 0.0
    %637 = vmatpush2.msra.mxu0 0.0
    %638 = vmatprep.subr.mxu0 0.0
    %639 = vmatpush2.msra.mxu0 0.0
    %640 = vmatprep.subr.mxu0 0.0
    %641 = vmatpush2.msra.mxu0 0.0
    %642 = vmatprep.subr.mxu0 0.0
    %643 = vmatpush2.msra.mxu0 0.0
    %644 = vmatprep.subr.mxu0 0.0
    %645 = vmatpush2.msra.mxu0 0.0
    %646 = vmatprep.subr.mxu0 0.0
    %647 = vmatpush2.msra.mxu0 0.0
    %648 = vmatprep.subr.mxu0 0.0
    %649 = vmatpush2.msra.mxu0 0.0
    %650 = vmatprep.subr.mxu0 0.0
    %651 = vmatpush2.msra.mxu0 0.0
    %652 = vmatprep.mubr.f32.mxu0 0.0
    %653 = vmatmul.mubr.f32.gmra.mxu0 %v586
    %v654 = vpop.f32.mrf.mxu0
    %v655 = vadd.f32 0.0, %v654
    %v656 = vpop.f32.mrf.mxu0
    %657 = vdwg.mxu0
    %v659 = vrot.slane %v655, 5
    %v660 = vrot.slane %v655, 6
    %v663 = vadd.f32 %v165, %v659
    %v664 = vadd.f32 %v170, %v660
    %v665 = vxor.u32 %v663, 2147483648
    %v666 = vxor.u32 %v664, 2147483648
    %v667 = vmul.f32 %v665, 1.442695
    %v668 = vpow.pop %v667
    %v669 = vmul.f32 %v666, 1.442695
    %v670 = vpow.pop %v669
    %v671 = vadd.f32 %v668, 1.0
    %v672 = vadd.f32 %v670, 1.0
    %v673 = vrcp.pop %v671
    %v674 = vmul.f32 1.0, %v673
    %v675 = vrcp.pop %v672
    %v676 = vmul.f32 1.0, %v675
    %v677 = vtanh.pop %v663
    %v678 = vtanh.pop %v664
    %v681 = vrot.slane %v565, 7
    %v682 = vrot.slane %v566, 7
    %v685 = vmul.f32 %v674, %v681
    %v686 = vmul.f32 %v676, %v682
    %689 = vrot.lane.b32.xlu0 %v677, 64
    %v690 = vpop.permute.xlu0 %689
    %691 = vrot.lane.b32.xlu0 %v678, 64
    %v692 = vpop.permute.xlu0 %691
    %v695 = vmul.f32 %v674, %v690
    %v696 = vmul.f32 %v676, %v692
    %699 = vrot.lane.b32.xlu0 %v695, 32
    %v700 = vpop.permute.xlu0 %699
    %701 = vrot.lane.b32.xlu0 %v696, 32
    %v702 = vpop.permute.xlu0 %701
    %v705 = vadd.f32 %v685, %v700
    %v706 = vadd.f32 %v686, %v702
    %v707 = vtanh.pop %v705
    %v708 = vtanh.pop %v706
    %711 = vrot.lane.b32.xlu0 %v707, 64
    %v712 = vpop.permute.xlu0 %711
    %713 = vrot.lane.b32.xlu0 %v708, 64
    %v714 = vpop.permute.xlu0 %713
    %v717 = vmul.f32 %v674, %v712
    %v718 = vmul.f32 %v676, %v714
    %v721 = vrot.slane %v717, 3
    %v722 = vrot.slane %v718, 2
    %v723 = vsel %vm304, %v722, %v721
    %724 = vrot.lane.b32.xlu0 %v723, 32
    %v725 = vpop.permute.xlu0 %724
    %v726 = vsel %vm173, %v725, 0
    %728 = vmatprep.subr.mxu0 0.0
    %729 = vmatpush1.msra.mxu0 0.0
    %730 = vmatprep.subr.mxu0 0.0
    %731 = vmatpush1.msra.mxu0 0.0
    %732 = vmatprep.subr.mxu0 0.0
    %733 = vmatpush1.msra.mxu0 0.0
    %734 = vmatprep.subr.mxu0 0.0
    %735 = vmatpush1.msra.mxu0 0.0
    %736 = vmatprep.subr.mxu0 0.0
    %737 = vmatpush1.msra.mxu0 0.0
    %738 = vmatprep.subr.mxu0 0.0
    %739 = vmatpush1.msra.mxu0 0.0
    %740 = vmatprep.subr.mxu0 0.0
    %741 = vmatpush1.msra.mxu0 0.0
    %742 = vmatprep.subr.mxu0 0.0
    %743 = vmatpush1.msra.mxu0 0.0
    %744 = vmatprep.subr.mxu0 0.0
    %745 = vmatpush1.msra.mxu0 0.0
    %746 = vmatprep.subr.mxu0 0.0
    %747 = vmatpush1.msra.mxu0 0.0
    %748 = vmatprep.subr.mxu0 0.0
    %749 = vmatpush1.msra.mxu0 0.0
    %750 = vmatprep.subr.mxu0 0.0
    %751 = vmatpush1.msra.mxu0 0.0
    %752 = vmatprep.subr.mxu0 0.0
    %753 = vmatpush1.msra.mxu0 %v81
    %754 = vmatprep.subr.mxu0 0.0
    %755 = vmatpush1.msra.mxu0 %v80
    %756 = vmatprep.subr.mxu0 0.0
    %757 = vmatpush1.msra.mxu0 %v79
    %758 = vmatprep.subr.mxu0 0.0
    %759 = vmatpush1.msra.mxu0 %v78
    %760 = vmatprep.subr.mxu0 0.0
    %761 = vmatpush2.msra.mxu0 0.0
    %762 = vmatprep.subr.mxu0 0.0
    %763 = vmatpush2.msra.mxu0 0.0
    %764 = vmatprep.subr.mxu0 0.0
    %765 = vmatpush2.msra.mxu0 0.0
    %766 = vmatprep.subr.mxu0 0.0
    %767 = vmatpush2.msra.mxu0 0.0
    %768 = vmatprep.subr.mxu0 0.0
    %769 = vmatpush2.msra.mxu0 0.0
    %770 = vmatprep.subr.mxu0 0.0
    %771 = vmatpush2.msra.mxu0 0.0
    %772 = vmatprep.subr.mxu0 0.0
    %773 = vmatpush2.msra.mxu0 0.0
    %774 = vmatprep.subr.mxu0 0.0
    %775 = vmatpush2.msra.mxu0 0.0
    %776 = vmatprep.subr.mxu0 0.0
    %777 = vmatpush2.msra.mxu0 0.0
    %778 = vmatprep.subr.mxu0 0.0
    %779 = vmatpush2.msra.mxu0 0.0
    %780 = vmatprep.subr.mxu0 0.0
    %781 = vmatpush2.msra.mxu0 0.0
    %782 = vmatprep.subr.mxu0 0.0
    %783 = vmatpush2.msra.mxu0 0.0
    %784 = vmatprep.subr.mxu0 0.0
    %785 = vmatpush2.msra.mxu0 0.0
    %786 = vmatprep.subr.mxu0 0.0
    %787 = vmatpush2.msra.mxu0 0.0
    %788 = vmatprep.subr.mxu0 0.0
    %789 = vmatpush2.msra.mxu0 0.0
    %790 = vmatprep.subr.mxu0 0.0
    %791 = vmatpush2.msra.mxu0 0.0
    %792 = vmatprep.mubr.f32.mxu0 0.0
    %793 = vmatmul.mubr.f32.gmra.mxu0 %v726
    %v794 = vpop.f32.mrf.mxu0
    %v795 = vadd.f32 0.0, %v794
    %v796 = vpop.f32.mrf.mxu0
    %797 = vdwg.mxu0
    %v799 = vrot.slane %v795, 4
    %v800 = vrot.slane %v795, 5
    %v803 = vadd.f32 %v165, %v799
    %v804 = vadd.f32 %v170, %v800
    %v805 = vxor.u32 %v803, 2147483648
    %v806 = vxor.u32 %v804, 2147483648
    %v807 = vmul.f32 %v805, 1.442695
    %v808 = vpow.pop %v807
    %v809 = vmul.f32 %v806, 1.442695
    %v810 = vpow.pop %v809
    %v811 = vadd.f32 %v808, 1.0
    %v812 = vadd.f32 %v810, 1.0
    %v813 = vrcp.pop %v811
    %v814 = vmul.f32 1.0, %v813
    %v815 = vrcp.pop %v812
    %v816 = vmul.f32 1.0, %v815
    %v817 = vtanh.pop %v803
    %v818 = vtanh.pop %v804
    %v821 = vrot.slane %v705, 7
    %v822 = vrot.slane %v706, 7
    %v825 = vmul.f32 %v814, %v821
    %v826 = vmul.f32 %v816, %v822
    %829 = vrot.lane.b32.xlu0 %v817, 64
    %v830 = vpop.permute.xlu0 %829
    %831 = vrot.lane.b32.xlu0 %v818, 64
    %v832 = vpop.permute.xlu0 %831
    %v835 = vmul.f32 %v814, %v830
    %v836 = vmul.f32 %v816, %v832
    %839 = vrot.lane.b32.xlu0 %v835, 32
    %v840 = vpop.permute.xlu0 %839
    %841 = vrot.lane.b32.xlu0 %v836, 32
    %v842 = vpop.permute.xlu0 %841
    %v845 = vadd.f32 %v825, %v840
    %v846 = vadd.f32 %v826, %v842
    %v847 = vtanh.pop %v845
    %v848 = vtanh.pop %v846
    %851 = vrot.lane.b32.xlu0 %v847, 64
    %v852 = vpop.permute.xlu0 %851
    %853 = vrot.lane.b32.xlu0 %v848, 64
    %v854 = vpop.permute.xlu0 %853
    %v857 = vmul.f32 %v814, %v852
    %v858 = vmul.f32 %v816, %v854
    %v861 = vrot.slane %v857, 4
    %v862 = vrot.slane %v858, 3
    %v863 = vsel %vm304, %v862, %v861
    %864 = vrot.lane.b32.xlu0 %v863, 32
    %v865 = vpop.permute.xlu0 %864
    %v866 = vsel %vm173, %v865, 0
    %868 = vmatprep.subr.mxu0 0.0
    %869 = vmatpush1.msra.mxu0 0.0
    %870 = vmatprep.subr.mxu0 0.0
    %871 = vmatpush1.msra.mxu0 0.0
    %872 = vmatprep.subr.mxu0 0.0
    %873 = vmatpush1.msra.mxu0 0.0
    %874 = vmatprep.subr.mxu0 0.0
    %875 = vmatpush1.msra.mxu0 0.0
    %876 = vmatprep.subr.mxu0 0.0
    %877 = vmatpush1.msra.mxu0 0.0
    %878 = vmatprep.subr.mxu0 0.0
    %879 = vmatpush1.msra.mxu0 0.0
    %880 = vmatprep.subr.mxu0 0.0
    %881 = vmatpush1.msra.mxu0 0.0
    %882 = vmatprep.subr.mxu0 0.0
    %883 = vmatpush1.msra.mxu0 0.0
    %884 = vmatprep.subr.mxu0 0.0
    %885 = vmatpush1.msra.mxu0 0.0
    %886 = vmatprep.subr.mxu0 0.0
    %887 = vmatpush1.msra.mxu0 0.0
    %888 = vmatprep.subr.mxu0 0.0
    %889 = vmatpush1.msra.mxu0 0.0
    %890 = vmatprep.subr.mxu0 0.0
    %891 = vmatpush1.msra.mxu0 0.0
    %892 = vmatprep.subr.mxu0 0.0
    %893 = vmatpush1.msra.mxu0 %v81
    %894 = vmatprep.subr.mxu0 0.0
    %895 = vmatpush1.msra.mxu0 %v80
    %896 = vmatprep.subr.mxu0 0.0
    %897 = vmatpush1.msra.mxu0 %v79
    %898 = vmatprep.subr.mxu0 0.0
    %899 = vmatpush1.msra.mxu0 %v78
    %900 = vmatprep.subr.mxu0 0.0
    %901 = vmatpush2.msra.mxu0 0.0
    %902 = vmatprep.subr.mxu0 0.0
    %903 = vmatpush2.msra.mxu0 0.0
    %904 = vmatprep.subr.mxu0 0.0
    %905 = vmatpush2.msra.mxu0 0.0
    %906 = vmatprep.subr.mxu0 0.0
    %907 = vmatpush2.msra.mxu0 0.0
    %908 = vmatprep.subr.mxu0 0.0
    %909 = vmatpush2.msra.mxu0 0.0
    %910 = vmatprep.subr.mxu0 0.0
    %911 = vmatpush2.msra.mxu0 0.0
    %912 = vmatprep.subr.mxu0 0.0
    %913 = vmatpush2.msra.mxu0 0.0
    %914 = vmatprep.subr.mxu0 0.0
    %915 = vmatpush2.msra.mxu0 0.0
    %916 = vmatprep.subr.mxu0 0.0
    %917 = vmatpush2.msra.mxu0 0.0
    %918 = vmatprep.subr.mxu0 0.0
    %919 = vmatpush2.msra.mxu0 0.0
    %920 = vmatprep.subr.mxu0 0.0
    %921 = vmatpush2.msra.mxu0 0.0
    %922 = vmatprep.subr.mxu0 0.0
    %923 = vmatpush2.msra.mxu0 0.0
    %924 = vmatprep.subr.mxu0 0.0
    %925 = vmatpush2.msra.mxu0 0.0
    %926 = vmatprep.subr.mxu0 0.0
    %927 = vmatpush2.msra.mxu0 0.0
    %928 = vmatprep.subr.mxu0 0.0
    %929 = vmatpush2.msra.mxu0 0.0
    %930 = vmatprep.subr.mxu0 0.0
    %931 = vmatpush2.msra.mxu0 0.0
    %932 = vmatprep.mubr.f32.mxu0 0.0
    %933 = vmatmul.mubr.f32.gmra.mxu0 %v866
    %v934 = vpop.f32.mrf.mxu0
    %v935 = vadd.f32 0.0, %v934
    %v936 = vpop.f32.mrf.mxu0
    %937 = vdwg.mxu0
    %v939 = vrot.slane %v935, 3
    %v940 = vrot.slane %v935, 4
    %v943 = vadd.f32 %v165, %v939
    %v944 = vadd.f32 %v170, %v940
    %v945 = vxor.u32 %v943, 2147483648
    %v946 = vxor.u32 %v944, 2147483648
    %v947 = vmul.f32 %v945, 1.442695
    %v948 = vpow.pop %v947
    %v949 = vmul.f32 %v946, 1.442695
    %v950 = vpow.pop %v949
    %v951 = vadd.f32 %v948, 1.0
    %v952 = vadd.f32 %v950, 1.0
    %v953 = vrcp.pop %v951
    %v954 = vmul.f32 1.0, %v953
    %v955 = vrcp.pop %v952
    %v956 = vmul.f32 1.0, %v955
    %v957 = vtanh.pop %v943
    %v958 = vtanh.pop %v944
    %v961 = vrot.slane %v845, 7
    %v962 = vrot.slane %v846, 7
    %v965 = vmul.f32 %v954, %v961
    %v966 = vmul.f32 %v956, %v962
    %969 = vrot.lane.b32.xlu0 %v957, 64
    %v970 = vpop.permute.xlu0 %969
    %971 = vrot.lane.b32.xlu0 %v958, 64
    %v972 = vpop.permute.xlu0 %971
    %v975 = vmul.f32 %v954, %v970
    %v976 = vmul.f32 %v956, %v972
    %979 = vrot.lane.b32.xlu0 %v975, 32
    %v980 = vpop.permute.xlu0 %979
    %981 = vrot.lane.b32.xlu0 %v976, 32
    %v982 = vpop.permute.xlu0 %981
    %v985 = vadd.f32 %v965, %v980
    %v986 = vadd.f32 %v966, %v982
    %v987 = vtanh.pop %v985
    %v988 = vtanh.pop %v986
    %991 = vrot.lane.b32.xlu0 %v987, 64
    %v992 = vpop.permute.xlu0 %991
    %993 = vrot.lane.b32.xlu0 %v988, 64
    %v994 = vpop.permute.xlu0 %993
    %v997 = vmul.f32 %v954, %v992
    %v998 = vmul.f32 %v956, %v994
    %v1001 = vrot.slane %v997, 5
    %v1002 = vrot.slane %v998, 4
    %v1003 = vsel %vm304, %v1002, %v1001
    %1004 = vrot.lane.b32.xlu0 %v1003, 32
    %v1005 = vpop.permute.xlu0 %1004
    %v1006 = vsel %vm173, %v1005, 0
    %1008 = vmatprep.subr.mxu0 0.0
    %1009 = vmatpush1.msra.mxu0 0.0
    %1010 = vmatprep.subr.mxu0 0.0
    %1011 = vmatpush1.msra.mxu0 0.0
    %1012 = vmatprep.subr.mxu0 0.0
    %1013 = vmatpush1.msra.mxu0 0.0
    %1014 = vmatprep.subr.mxu0 0.0
    %1015 = vmatpush1.msra.mxu0 0.0
    %1016 = vmatprep.subr.mxu0 0.0
    %1017 = vmatpush1.msra.mxu0 0.0
    %1018 = vmatprep.subr.mxu0 0.0
    %1019 = vmatpush1.msra.mxu0 0.0
    %1020 = vmatprep.subr.mxu0 0.0
    %1021 = vmatpush1.msra.mxu0 0.0
    %1022 = vmatprep.subr.mxu0 0.0
    %1023 = vmatpush1.msra.mxu0 0.0
    %1024 = vmatprep.subr.mxu0 0.0
    %1025 = vmatpush1.msra.mxu0 0.0
    %1026 = vmatprep.subr.mxu0 0.0
    %1027 = vmatpush1.msra.mxu0 0.0
    %1028 = vmatprep.subr.mxu0 0.0
    %1029 = vmatpush1.msra.mxu0 0.0
    %1030 = vmatprep.subr.mxu0 0.0
    %1031 = vmatpush1.msra.mxu0 0.0
    %1032 = vmatprep.subr.mxu0 0.0
    %1033 = vmatpush1.msra.mxu0 %v81
    %1034 = vmatprep.subr.mxu0 0.0
    %1035 = vmatpush1.msra.mxu0 %v80
    %1036 = vmatprep.subr.mxu0 0.0
    %1037 = vmatpush1.msra.mxu0 %v79
    %1038 = vmatprep.subr.mxu0 0.0
    %1039 = vmatpush1.msra.mxu0 %v78
    %1040 = vmatprep.subr.mxu0 0.0
    %1041 = vmatpush2.msra.mxu0 0.0
    %1042 = vmatprep.subr.mxu0 0.0
    %1043 = vmatpush2.msra.mxu0 0.0
    %1044 = vmatprep.subr.mxu0 0.0
    %1045 = vmatpush2.msra.mxu0 0.0
    %1046 = vmatprep.subr.mxu0 0.0
    %1047 = vmatpush2.msra.mxu0 0.0
    %1048 = vmatprep.subr.mxu0 0.0
    %1049 = vmatpush2.msra.mxu0 0.0
    %1050 = vmatprep.subr.mxu0 0.0
    %1051 = vmatpush2.msra.mxu0 0.0
    %1052 = vmatprep.subr.mxu0 0.0
    %1053 = vmatpush2.msra.mxu0 0.0
    %1054 = vmatprep.subr.mxu0 0.0
    %1055 = vmatpush2.msra.mxu0 0.0
    %1056 = vmatprep.subr.mxu0 0.0
    %1057 = vmatpush2.msra.mxu0 0.0
    %1058 = vmatprep.subr.mxu0 0.0
    %1059 = vmatpush2.msra.mxu0 0.0
    %1060 = vmatprep.subr.mxu0 0.0
    %1061 = vmatpush2.msra.mxu0 0.0
    %1062 = vmatprep.subr.mxu0 0.0
    %1063 = vmatpush2.msra.mxu0 0.0
    %1064 = vmatprep.subr.mxu0 0.0
    %1065 = vmatpush2.msra.mxu0 0.0
    %1066 = vmatprep.subr.mxu0 0.0
    %1067 = vmatpush2.msra.mxu0 0.0
    %1068 = vmatprep.subr.mxu0 0.0
    %1069 = vmatpush2.msra.mxu0 0.0
    %1070 = vmatprep.subr.mxu0 0.0
    %1071 = vmatpush2.msra.mxu0 0.0
    %1072 = vmatprep.mubr.f32.mxu0 0.0
    %1073 = vmatmul.mubr.f32.gmra.mxu0 %v1006
    %v1074 = vpop.f32.mrf.mxu0
    %v1075 = vadd.f32 0.0, %v1074
    %v1076 = vpop.f32.mrf.mxu0
    %1077 = vdwg.mxu0
    %v1079 = vrot.slane %v1075, 2
    %v1080 = vrot.slane %v1075, 3
    %v1083 = vadd.f32 %v165, %v1079
    %v1084 = vadd.f32 %v170, %v1080
    %v1085 = vxor.u32 %v1083, 2147483648
    %v1086 = vxor.u32 %v1084, 2147483648
    %v1087 = vmul.f32 %v1085, 1.442695
    %v1088 = vpow.pop %v1087
    %v1089 = vmul.f32 %v1086, 1.442695
    %v1090 = vpow.pop %v1089
    %v1091 = vadd.f32 %v1088, 1.0
    %v1092 = vadd.f32 %v1090, 1.0
    %v1093 = vrcp.pop %v1091
    %v1094 = vmul.f32 1.0, %v1093
    %v1095 = vrcp.pop %v1092
    %v1096 = vmul.f32 1.0, %v1095
    %v1097 = vtanh.pop %v1083
    %v1098 = vtanh.pop %v1084
    %v1101 = vrot.slane %v985, 7
    %v1102 = vrot.slane %v986, 7
    %v1105 = vmul.f32 %v1094, %v1101
    %v1106 = vmul.f32 %v1096, %v1102
    %1109 = vrot.lane.b32.xlu0 %v1097, 64
    %v1110 = vpop.permute.xlu0 %1109
    %1111 = vrot.lane.b32.xlu0 %v1098, 64
    %v1112 = vpop.permute.xlu0 %1111
    %v1115 = vmul.f32 %v1094, %v1110
    %v1116 = vmul.f32 %v1096, %v1112
    %1119 = vrot.lane.b32.xlu0 %v1115, 32
    %v1120 = vpop.permute.xlu0 %1119
    %1121 = vrot.lane.b32.xlu0 %v1116, 32
    %v1122 = vpop.permute.xlu0 %1121
    %v1125 = vadd.f32 %v1105, %v1120
    %v1126 = vadd.f32 %v1106, %v1122
    %v1127 = vtanh.pop %v1125
    %v1128 = vtanh.pop %v1126
    %1131 = vrot.lane.b32.xlu0 %v1127, 64
    %v1132 = vpop.permute.xlu0 %1131
    %1133 = vrot.lane.b32.xlu0 %v1128, 64
    %v1134 = vpop.permute.xlu0 %1133
    %v1137 = vmul.f32 %v1094, %v1132
    %v1138 = vmul.f32 %v1096, %v1134
    %v1141 = vrot.slane %v1137, 6
    %v1142 = vrot.slane %v1138, 5
    %v1143 = vsel %vm304, %v1142, %v1141
    %1144 = vrot.lane.b32.xlu0 %v1143, 32
    %v1145 = vpop.permute.xlu0 %1144
    %v1146 = vsel %vm173, %v1145, 0
    %1148 = vmatprep.subr.mxu0 0.0
    %1149 = vmatpush1.msra.mxu0 0.0
    %1150 = vmatprep.subr.mxu0 0.0
    %1151 = vmatpush1.msra.mxu0 0.0
    %1152 = vmatprep.subr.mxu0 0.0
    %1153 = vmatpush1.msra.mxu0 0.0
    %1154 = vmatprep.subr.mxu0 0.0
    %1155 = vmatpush1.msra.mxu0 0.0
    %1156 = vmatprep.subr.mxu0 0.0
    %1157 = vmatpush1.msra.mxu0 0.0
    %1158 = vmatprep.subr.mxu0 0.0
    %1159 = vmatpush1.msra.mxu0 0.0
    %1160 = vmatprep.subr.mxu0 0.0
    %1161 = vmatpush1.msra.mxu0 0.0
    %1162 = vmatprep.subr.mxu0 0.0
    %1163 = vmatpush1.msra.mxu0 0.0
    %1164 = vmatprep.subr.mxu0 0.0
    %1165 = vmatpush1.msra.mxu0 0.0
    %1166 = vmatprep.subr.mxu0 0.0
    %1167 = vmatpush1.msra.mxu0 0.0
    %1168 = vmatprep.subr.mxu0 0.0
    %1169 = vmatpush1.msra.mxu0 0.0
    %1170 = vmatprep.subr.mxu0 0.0
    %1171 = vmatpush1.msra.mxu0 0.0
    %1172 = vmatprep.subr.mxu0 0.0
    %1173 = vmatpush1.msra.mxu0 %v81
    %1174 = vmatprep.subr.mxu0 0.0
    %1175 = vmatpush1.msra.mxu0 %v80
    %1176 = vmatprep.subr.mxu0 0.0
    %1177 = vmatpush1.msra.mxu0 %v79
    %1178 = vmatprep.subr.mxu0 0.0
    %1179 = vmatpush1.msra.mxu0 %v78
    %1180 = vmatprep.subr.mxu0 0.0
    %1181 = vmatpush2.msra.mxu0 0.0
    %1182 = vmatprep.subr.mxu0 0.0
    %1183 = vmatpush2.msra.mxu0 0.0
    %1184 = vmatprep.subr.mxu0 0.0
    %1185 = vmatpush2.msra.mxu0 0.0
    %1186 = vmatprep.subr.mxu0 0.0
    %1187 = vmatpush2.msra.mxu0 0.0
    %1188 = vmatprep.subr.mxu0 0.0
    %1189 = vmatpush2.msra.mxu0 0.0
    %1190 = vmatprep.subr.mxu0 0.0
    %1191 = vmatpush2.msra.mxu0 0.0
    %1192 = vmatprep.subr.mxu0 0.0
    %1193 = vmatpush2.msra.mxu0 0.0
    %1194 = vmatprep.subr.mxu0 0.0
    %1195 = vmatpush2.msra.mxu0 0.0
    %1196 = vmatprep.subr.mxu0 0.0
    %1197 = vmatpush2.msra.mxu0 0.0
    %1198 = vmatprep.subr.mxu0 0.0
    %1199 = vmatpush2.msra.mxu0 0.0
    %1200 = vmatprep.subr.mxu0 0.0
    %1201 = vmatpush2.msra.mxu0 0.0
    %1202 = vmatprep.subr.mxu0 0.0
    %1203 = vmatpush2.msra.mxu0 0.0
    %1204 = vmatprep.subr.mxu0 0.0
    %1205 = vmatpush2.msra.mxu0 0.0
    %1206 = vmatprep.subr.mxu0 0.0
    %1207 = vmatpush2.msra.mxu0 0.0
    %1208 = vmatprep.subr.mxu0 0.0
    %1209 = vmatpush2.msra.mxu0 0.0
    %1210 = vmatprep.subr.mxu0 0.0
    %1211 = vmatpush2.msra.mxu0 0.0
    %1212 = vmatprep.mubr.f32.mxu0 0.0
    %1213 = vmatmul.mubr.f32.gmra.mxu0 %v1146
    %v1214 = vpop.f32.mrf.mxu0
    %v1215 = vadd.f32 0.0, %v1214
    %v1216 = vpop.f32.mrf.mxu0
    %1217 = vdwg.mxu0
    %v1219 = vrot.slane %v1215, 1
    %v1220 = vrot.slane %v1215, 2
    %v1223 = vadd.f32 %v165, %v1219
    %v1224 = vadd.f32 %v170, %v1220
    %v1225 = vxor.u32 %v1223, 2147483648
    %v1226 = vxor.u32 %v1224, 2147483648
    %v1227 = vmul.f32 %v1225, 1.442695
    %v1228 = vpow.pop %v1227
    %v1229 = vmul.f32 %v1226, 1.442695
    %v1230 = vpow.pop %v1229
    %v1231 = vadd.f32 %v1228, 1.0
    %v1232 = vadd.f32 %v1230, 1.0
    %v1233 = vrcp.pop %v1231
    %v1234 = vmul.f32 1.0, %v1233
    %v1235 = vrcp.pop %v1232
    %v1236 = vmul.f32 1.0, %v1235
    %v1237 = vtanh.pop %v1223
    %v1238 = vtanh.pop %v1224
    %v1241 = vrot.slane %v1125, 7
    %v1242 = vrot.slane %v1126, 7
    %v1245 = vmul.f32 %v1234, %v1241
    %v1246 = vmul.f32 %v1236, %v1242
    %1249 = vrot.lane.b32.xlu0 %v1237, 64
    %v1250 = vpop.permute.xlu0 %1249
    %1251 = vrot.lane.b32.xlu0 %v1238, 64
    %v1252 = vpop.permute.xlu0 %1251
    %v1255 = vmul.f32 %v1234, %v1250
    %v1256 = vmul.f32 %v1236, %v1252
    %1259 = vrot.lane.b32.xlu0 %v1255, 32
    %v1260 = vpop.permute.xlu0 %1259
    %1261 = vrot.lane.b32.xlu0 %v1256, 32
    %v1262 = vpop.permute.xlu0 %1261
    %v1265 = vadd.f32 %v1245, %v1260
    %v1266 = vadd.f32 %v1246, %v1262
    %v1267 = vtanh.pop %v1265
    %v1268 = vtanh.pop %v1266
    %1271 = vrot.lane.b32.xlu0 %v1267, 64
    %v1272 = vpop.permute.xlu0 %1271
    %1273 = vrot.lane.b32.xlu0 %v1268, 64
    %v1274 = vpop.permute.xlu0 %1273
    %v1277 = vmul.f32 %v1234, %v1272
    %v1278 = vmul.f32 %v1236, %v1274
    %1280 = vrot.lane.b32.xlu0 %v443, 64
    %v1281 = vpop.permute.xlu0 %1280
    %1283 = vrot.lane.b32.xlu0 %v583, 96
    %v1284 = vpop.permute.xlu0 %1283
    %1288 = vrot.lane.b32.xlu0 %v1003, 64
    %v1289 = vpop.permute.xlu0 %1288
    %1291 = vrot.lane.b32.xlu0 %v1143, 96
    %v1292 = vpop.permute.xlu0 %1291
    %v1296 = vrot.slane %v1277, 7
    %v1297 = vrot.slane %v1278, 6
    %v1298 = vsel %vm304, %v1297, %v1296
    %v1300 = vsel %vm173, %v307, %v1281
    %vm1301 = vcmask 523264
    %v1302 = vsel %vm1301, %v1300, %v1284
    %vm1303 = vcmask 785408
    %v1304 = vsel %vm1303, %v1302, %v723
    %v1305 = vsel %vm173, %v865, %v1289
    %v1306 = vsel %vm1301, %v1305, %v1292
    %v1307 = vsel %vm1303, %v1306, %v1298
    %v1308 = vld [vmem:[#allocation8] sm:$0xff]
    %v1309 = vld [vmem:[#allocation8 + $0x8] sm:$0xff]
    %v1310 = vld [vmem:[#allocation8 + $0x10] sm:$0xff]
    %v1311 = vld [vmem:[#allocation8 + $0x18] sm:$0xff]
    %v1312 = vld [vmem:[#allocation8 + $0x20] sm:$0xff]
    %v1313 = vld [vmem:[#allocation8 + $0x28] sm:$0xff]
    %v1314 = vld [vmem:[#allocation8 + $0x30] sm:$0xff]
    %v1315 = vld [vmem:[#allocation8 + $0x38] sm:$0xff]
    %v1316 = vld [vmem:[#allocation8 + $0x40] sm:$0xff]
    %v1317 = vld [vmem:[#allocation8 + $0x48] sm:$0xff]
    %v1318 = vld [vmem:[#allocation8 + $0x50] sm:$0xff]
    %v1319 = vld [vmem:[#allocation8 + $0x58] sm:$0xff]
    %v1320 = vld [vmem:[#allocation8 + $0x60] sm:$0xff]
    %v1321 = vld [vmem:[#allocation8 + $0x68] sm:$0xff]
    %v1322 = vld [vmem:[#allocation8 + $0x70] sm:$0xff]
    %v1323 = vld [vmem:[#allocation8 + $0x78] sm:$0xff]
    %v1324 = vld [vmem:[#allocation8 + $0x80] sm:$0xff]
    %v1325 = vld [vmem:[#allocation8 + $0x88] sm:$0xff]
    %v1326 = vld [vmem:[#allocation8 + $0x90] sm:$0xff]
    %v1327 = vld [vmem:[#allocation8 + $0x98] sm:$0xff]
    %v1328 = vld [vmem:[#allocation8 + $0xa0] sm:$0xff]
    %v1329 = vld [vmem:[#allocation8 + $0xa8] sm:$0xff]
    %v1330 = vld [vmem:[#allocation8 + $0xb0] sm:$0xff]
    %v1331 = vld [vmem:[#allocation8 + $0xb8] sm:$0xff]
    %v1332 = vld [vmem:[#allocation8 + $0xc0] sm:$0xff]
    %v1333 = vld [vmem:[#allocation8 + $0xc8] sm:$0xff]
    %v1334 = vld [vmem:[#allocation8 + $0xd0] sm:$0xff]
    %v1335 = vld [vmem:[#allocation8 + $0xd8] sm:$0xff]
    %v1336 = vld [vmem:[#allocation8 + $0xe0] sm:$0xff]
    %v1337 = vld [vmem:[#allocation8 + $0xe8] sm:$0xff]
    %v1338 = vld [vmem:[#allocation8 + $0xf0] sm:$0xff]
    %v1339 = vld [vmem:[#allocation8 + $0xf8] sm:$0xff]
    %v1340 = vld [vmem:[%s5] sm:$0x1]
    %v1342 = vlaneseq
    %v1343 = vshrl.u32 %v1342, 7
    %v1344 = vsub.s32 0, %v1343
    %v1345 = vrot.slane %v1340, %v1344
    %1347 = vmatprep.subr.mxu0 0.0
    %1348 = vmatpush1.msra.mxu0 %v1323
    %1349 = vmatprep.subr.mxu0 0.0
    %1350 = vmatpush1.msra.mxu0 %v1322
    %1351 = vmatprep.subr.mxu0 0.0
    %1352 = vmatpush1.msra.mxu0 %v1321
    %1353 = vmatprep.subr.mxu0 0.0
    %1354 = vmatpush1.msra.mxu0 %v1320
    %1355 = vmatprep.subr.mxu0 0.0
    %1356 = vmatpush1.msra.mxu0 %v1319
    %1357 = vmatprep.subr.mxu0 0.0
    %1358 = vmatpush1.msra.mxu0 %v1318
    %1359 = vmatprep.subr.mxu0 0.0
    %1360 = vmatpush1.msra.mxu0 %v1317
    %1361 = vmatprep.subr.mxu0 0.0
    %1362 = vmatpush1.msra.mxu0 %v1316
    %1363 = vmatprep.subr.mxu0 0.0
    %1364 = vmatpush1.msra.mxu0 %v1315
    %1365 = vmatprep.subr.mxu0 0.0
    %1366 = vmatpush1.msra.mxu0 %v1314
    %1367 = vmatprep.subr.mxu0 0.0
    %1368 = vmatpush1.msra.mxu0 %v1313
    %1369 = vmatprep.subr.mxu0 0.0
    %1370 = vmatpush1.msra.mxu0 %v1312
    %1371 = vmatprep.subr.mxu0 0.0
    %1372 = vmatpush1.msra.mxu0 %v1311
    %1373 = vmatprep.subr.mxu0 0.0
    %1374 = vmatpush1.msra.mxu0 %v1310
    %1375 = vmatprep.subr.mxu0 0.0
    %1376 = vmatpush1.msra.mxu0 %v1309
    %1377 = vmatprep.subr.mxu0 0.0
    %1378 = vmatpush1.msra.mxu0 %v1308
    %1379 = vmatprep.subr.mxu0 0.0
    %1380 = vmatpush2.msra.mxu0 %v1339
    %1381 = vmatprep.subr.mxu0 0.0
    %1382 = vmatpush2.msra.mxu0 %v1338
    %1383 = vmatprep.subr.mxu0 0.0
    %1384 = vmatpush2.msra.mxu0 %v1337
    %1385 = vmatprep.subr.mxu0 0.0
    %1386 = vmatpush2.msra.mxu0 %v1336
    %1387 = vmatprep.subr.mxu0 0.0
    %1388 = vmatpush2.msra.mxu0 %v1335
    %1389 = vmatprep.subr.mxu0 0.0
    %1390 = vmatpush2.msra.mxu0 %v1334
    %1391 = vmatprep.subr.mxu0 0.0
    %1392 = vmatpush2.msra.mxu0 %v1333
    %1393 = vmatprep.subr.mxu0 0.0
    %1394 = vmatpush2.msra.mxu0 %v1332
    %1395 = vmatprep.subr.mxu0 0.0
    %1396 = vmatpush2.msra.mxu0 %v1331
    %1397 = vmatprep.subr.mxu0 0.0
    %1398 = vmatpush2.msra.mxu0 %v1330
    %1399 = vmatprep.subr.mxu0 0.0
    %1400 = vmatpush2.msra.mxu0 %v1329
    %1401 = vmatprep.subr.mxu0 0.0
    %1402 = vmatpush2.msra.mxu0 %v1328
    %1403 = vmatprep.subr.mxu0 0.0
    %1404 = vmatpush2.msra.mxu0 %v1327
    %1405 = vmatprep.subr.mxu0 0.0
    %1406 = vmatpush2.msra.mxu0 %v1326
    %1407 = vmatprep.subr.mxu0 0.0
    %1408 = vmatpush2.msra.mxu0 %v1325
    %1409 = vmatprep.subr.mxu0 0.0
    %1410 = vmatpush2.msra.mxu0 %v1324
    %1411 = vmatprep.mubr.f32.mxu0 %v1307
    %1412 = vmatmul.mubr.f32.gmra.mxu0 %v1304
    %v1413 = vpop.f32.mrf.mxu0
    %v1414 = vadd.f32 %v1345, %v1413
    %v1415 = vpop.f32.mrf.mxu0
    %1416 = vdwg.mxu0
    %v1417 = vxor.u32 %v1414, 2147483648
    %v1418 = vmul.f32 %v1417, 1.442695
    %v1419 = vpow.pop %v1418
    %v1420 = vadd.f32 %v1419, 1.0
    %v1421 = vrcp.pop %v1420
    %v1422 = vmul.f32 1.0, %v1421
    %1423 = vst [vmem:[#allocation10] sm:$0x3] %v1422
    // Predicated region
    $region42: #{tpu_custom_call.1} parent=1 // pred_check
      _
    $region43: #{tpu_custom_call.1} parent=1 // pred_check_branch
      %1425 = sbr.rel (0) target = $region45
    $region44: #{tpu_custom_call.1} parent=1 // pred_region
      %s1427 = ssub.s32 32, 32
      %1428 = vsyncadd [#allocation4], %s1427
      %s1430 = sshll.u32 [#allocation10], 4
      %s1431 = int_to_ptr.vmem [resolvable:$true] %s1430
      %1433 = dma.vmem_to_hbm [thread:$0]  %s1431, 32, %s6, [#allocation4]
    $region45: #{tpu_custom_call.1} parent=1 // pred_fallthru
      _
    // Predicated region
    $region46: #{tpu_custom_call.1} parent=1 // pred_check
      _
    $region47: #{tpu_custom_call.1} parent=1 // pred_check_branch
      %1435 = sbr.rel (0) target = $region49
    $region48: #{tpu_custom_call.1} parent=1 // pred_region
      %1436 = dma.done [#allocation4], 32
    $region49: #{tpu_custom_call.1} parent=1 // pred_fallthru
      _
    %1437 = vsyncpa [#allocation3], 1
    %1438 = vsyncpa [#allocation6], 1
    %1439 = vsyncpa [#allocation9], 1
    %1440 = vsyncpa [#allocation4], 1

</llo_original>
